<compile_context>
chip_gen: v7x
topology: tpu7x:2x2x1
jax: 0.10.0
libtpu: 0.0.40
codegen_flags: <defaults>
</compile_context>

<pallas_src>
import math

import jax
import jax.numpy as jnp
from jax.experimental import pallas as pl
from jax.experimental.pallas import tpu as pltpu

_BN_EPS = 1e-5


def _residual_block_kernel(x_ref, w1_ref, w2_ref, ca_ref,
                           g1_ref, b1_ref, g2_ref, b2_ref,
                           out_ref, rp_ref):
    """Fused residual block.

    x_ref  : (N*H, W*C) f32   lane-dense input (conv1 source + identity branch)
    w1_ref : (3, W*C, W*C) bf16  banded row-GEMM weights of conv1
    w2_ref : (3, W*C, W*C) bf16  banded row-GEMM weights of conv2
    ca_ref : (W*C, W*C) f32   channel-averaging matrix (includes 1/(N*H*W))
    g*/b*  : (1, W*C) f32     BN affine params, pre-tiled over W
    out_ref: (N*H, W*C) f32   lane-dense output
    rp_ref : (N, H+2, W*C) f32 scratch: rows of the feature map + 2 zero halos
    """
    N, Hp, WC = rp_ref.shape
    H = Hp - 2
    NH = N * H

    # Zero ONLY the two halo rows once; they stay zero for both convolutions.
    zero_row = jnp.zeros((N, 1, WC), rp_ref.dtype)
    rp_ref[:, 0:1, :] = zero_row
    rp_ref[:, Hp - 1:Hp, :] = zero_row

    x_dense = x_ref[...]                                   # (N*H, W*C) f32

    def conv3x3(w_ref):
        # One banded matmul per kernel row: K = W*C, output stays lane-dense.
        acc = jnp.zeros((NH, WC), jnp.float32)
        for dy in range(3):
            tap = rp_ref[:, dy:dy + H, :].reshape(NH, WC).astype(jnp.bfloat16)
            acc = acc + jnp.dot(tap, w_ref[dy],
                                preferred_element_type=jnp.float32)
        return acc                                          # (N*H, W*C) f32

    def bn(z, g_ref, b_ref):
        # One-pass training-mode BN (biased variance) folded into scale+shift.
        s = jnp.sum(z, axis=0, keepdims=True)               # (1, W*C)
        sq = jnp.sum(z * z, axis=0, keepdims=True)          # (1, W*C)
        mean = jnp.dot(s, ca_ref[...], preferred_element_type=jnp.float32)
        ex2 = jnp.dot(sq, ca_ref[...], preferred_element_type=jnp.float32)
        var = ex2 - mean * mean
        scale = g_ref[...] * jax.lax.rsqrt(var + _BN_EPS)   # (1, W*C)
        shift = b_ref[...] - mean * scale
        return z * scale + shift

    # ---- left branch: conv1 -> BN1 -> ReLU -----------------------------------
    rp_ref[:, 1:H + 1, :] = x_dense.reshape(N, H, WC)
    y = jnp.maximum(bn(conv3x3(w1_ref), g1_ref, b1_ref), 0.0)

    # ---- left branch: conv2 -> BN2 (reuse the same padded-row scratch) -------
    rp_ref[:, 1:H + 1, :] = y.reshape(N, H, WC)
    z = bn(conv3x3(w2_ref), g2_ref, b2_ref)

    # ---- identity shortcut + final ReLU, single lane-dense store -------------
    out_ref[...] = jnp.maximum(z + x_dense, 0.0).astype(out_ref.dtype)


def _make_row_weights(w, W, C):
    """Fold a 3x3 / stride-1 / SAME conv into three banded (W*C, W*C) matrices.

    M[dy][wi*C + ci, wo*C + co] = w[dy, wi - wo + 1, ci, co]  (0 if |wi-wo| > 1)

    so   out[(n,h), :] += rows[(n, h+dy), :] @ M[dy]   reproduces the conv;
    the W-direction zero padding is implicit in the band structure.
    """
    mats = []
    for dy in range(3):
        m = sum(jnp.kron(jnp.eye(W, W, k=1 - dx, dtype=w.dtype), w[dy, dx])
                for dx in range(3))
        mats.append(m)
    return jnp.stack(mats).astype(jnp.bfloat16)


@jax.jit
def residual_block(x, w1, w2, g1, b1, g2, b2):
    """x: (N, H, W, C) f32 NHWC; w1/w2: (3,3,C,C) HWIO; BN params: (C,)."""
    N, H, W, C = x.shape
    WC = W * C
    count = N * H * W

    # Parameter-side prep (tiny, pure JAX):
    w1m = _make_row_weights(w1, W, C)                       # (3, WC, WC) bf16
    w2m = _make_row_weights(w2, W, C)
    lane = jnp.arange(WC)
    chan_avg = jnp.where((lane[:, None] % C) == (lane[None, :] % C),
                         1.0 / count, 0.0).astype(jnp.float32)

    def tile_param(p):                                      # (C,) -> (1, W*C)
        return jnp.tile(p.astype(jnp.float32), W).reshape(1, WC)

    x2d = x.reshape(N * H, WC)                              # lane-dense view

    vmem = pl.BlockSpec(memory_space=pltpu.MemorySpace.VMEM)
    out = pl.pallas_call(
        _residual_block_kernel,
        out_shape=jax.ShapeDtypeStruct((N * H, WC), x.dtype),
        in_specs=[vmem] * 8,
        out_specs=vmem,
        scratch_shapes=[pltpu.VMEM((N, H + 2, WC), jnp.float32)],
        compiler_params=pltpu.CompilerParams(
            vmem_limit_bytes=32 * 1024 * 1024),
    )(x2d, w1m, w2m, chan_avg,
      tile_param(g1), tile_param(b1), tile_param(g2), tile_param(b2))
    return out.reshape(N, H, W, C)


# ------------------------------ references -----------------------------------
def _conv_f32(v, w):
    return jax.lax.conv_general_dilated(
        v, w, window_strides=(1, 1), padding="SAME",
        dimension_numbers=("NHWC", "HWIO", "NHWC"))


def _conv_bf16(v, w):
    # Matches the kernel's MXU numerics: bf16 operands, f32 accumulation.
    return jax.lax.conv_general_dilated(
        v.astype(jnp.bfloat16), w.astype(jnp.bfloat16),
        window_strides=(1, 1), padding="SAME",
        dimension_numbers=("NHWC", "HWIO", "NHWC"),
        preferred_element_type=jnp.float32)


def _bn_ref(v, g, b):
    mean = jnp.mean(v, axis=(0, 1, 2), keepdims=True)
    var = jnp.mean((v - mean) ** 2, axis=(0, 1, 2), keepdims=True)
    return (v - mean) * jax.lax.rsqrt(var + _BN_EPS) * g + b


def residual_block_ref(x, w1, w2, g1, b1, g2, b2, conv=_conv_f32):
    y = jax.nn.relu(_bn_ref(conv(x, w1), g1, b1))
    z = _bn_ref(conv(y, w2), g2, b2)
    return jax.nn.relu(z + x)


if __name__ == "__main__":
    # Shapes consistent with ResidualBlock(inchannel=8, outchannel=8, stride=1);
    # W*C = 16*8 = 128 so the kernel layout is exactly one lane-tile wide.
    N, H, W, C = 2, 16, 16, 8

    key = jax.random.PRNGKey(0)
    k = jax.random.split(key, 7)

    x = jax.random.normal(k[0], (N, H, W, C), jnp.float32)
    fan_in = 3 * 3 * C
    w1 = jax.random.normal(k[1], (3, 3, C, C), jnp.float32) * math.sqrt(2.0 / fan_in)
    w2 = jax.random.normal(k[2], (3, 3, C, C), jnp.float32) * math.sqrt(2.0 / fan_in)
    g1 = 1.0 + 0.1 * jax.random.normal(k[3], (C,), jnp.float32)
    b1 = 0.1 * jax.random.normal(k[4], (C,), jnp.float32)
    g2 = 1.0 + 0.1 * jax.random.normal(k[5], (C,), jnp.float32)
    b2 = 0.1 * jax.random.normal(k[6], (C,), jnp.float32)

    out = jax.block_until_ready(residual_block(x, w1, w2, g1, b1, g2, b2))
    assert out.shape == (N, H, W, C)

    # Primary check: reference with matching bf16 MXU-operand numerics.
    ref_bf16 = residual_block_ref(x, w1, w2, g1, b1, g2, b2, conv=_conv_bf16)
    assert jnp.allclose(out, ref_bf16, atol=1e-2, rtol=1e-2), (
        float(jnp.max(jnp.abs(out - ref_bf16))))

    # Sanity check vs. the exact f32 module semantics (bf16-aware tolerance:
    # two convs with bf16 operands bound the deviation well below 5e-2 here).
    ref_f32 = residual_block_ref(x, w1, w2, g1, b1, g2, b2, conv=_conv_f32)
    assert jnp.allclose(out, ref_f32, atol=5e-2, rtol=5e-2), (
        float(jnp.max(jnp.abs(out - ref_f32))))

    print("KERNEL_OK")
</pallas_src>

<mosaic_0001>
module attributes {stable_mosaic.version = 11 : i64} {
  func.func @_residual_block_kernel(%arg0: memref<32x128xf32, #tpu.memory_space<vmem>>, %arg1: memref<3x128x128xbf16, #tpu.memory_space<vmem>>, %arg2: memref<3x128x128xbf16, #tpu.memory_space<vmem>>, %arg3: memref<128x128xf32, #tpu.memory_space<vmem>>, %arg4: memref<1x128xf32, #tpu.memory_space<vmem>>, %arg5: memref<1x128xf32, #tpu.memory_space<vmem>>, %arg6: memref<1x128xf32, #tpu.memory_space<vmem>>, %arg7: memref<1x128xf32, #tpu.memory_space<vmem>>, %arg8: memref<32x128xf32, #tpu.memory_space<vmem>>, %arg9: memref<2x18x128xf32, #tpu.memory_space<vmem>>) attributes {dimension_semantics = [], scalar_prefetch = 0 : i64, scratch_operands = 1 : i64, tpu.core_type = #tpu.core_type<tc>} {
    %cst = arith.constant 0.000000e+00 : f32
    %0 = vector.broadcast %cst : f32 to vector<2x1x128xf32>
    %c0 = arith.constant 0 : index
    %c0_0 = arith.constant 0 : index
    %c0_1 = arith.constant 0 : index
    %1 = vector.load %arg9[%c0, %c0_0, %c0_1] : memref<2x18x128xf32, #tpu.memory_space<vmem>>, vector<2x1x128xf32>
    tpu.vector_store %arg9[%c0, %c0_0, %c0_1], %0 {strides = array<i32>} : memref<2x18x128xf32, #tpu.memory_space<vmem>>, vector<2x1x128xf32>,
    %c0_2 = arith.constant 0 : index
    %c17 = arith.constant 17 : index
    %c0_3 = arith.constant 0 : index
    %2 = vector.load %arg9[%c0_2, %c17, %c0_3] : memref<2x18x128xf32, #tpu.memory_space<vmem>>, vector<2x1x128xf32>
    tpu.vector_store %arg9[%c0_2, %c17, %c0_3], %0 {strides = array<i32>} : memref<2x18x128xf32, #tpu.memory_space<vmem>>, vector<2x1x128xf32>,
    %c0_4 = arith.constant 0 : index
    %c0_5 = arith.constant 0 : index
    %3 = vector.load %arg0[%c0_4, %c0_5] : memref<32x128xf32, #tpu.memory_space<vmem>>, vector<32x128xf32>
    %4 = vector.shape_cast %3 : vector<32x128xf32> to vector<2x16x128xf32>
    %c0_6 = arith.constant 0 : index
    %c1 = arith.constant 1 : index
    %c0_7 = arith.constant 0 : index
    %5 = vector.load %arg9[%c0_6, %c1, %c0_7] : memref<2x18x128xf32, #tpu.memory_space<vmem>>, vector<2x16x128xf32>
    tpu.vector_store %arg9[%c0_6, %c1, %c0_7], %4 {strides = array<i32>} : memref<2x18x128xf32, #tpu.memory_space<vmem>>, vector<2x16x128xf32>,
    %cst_8 = arith.constant 0.000000e+00 : f32
    %6 = vector.broadcast %cst_8 : f32 to vector<32x128xf32>
    %c0_9 = arith.constant 0 : index
    %c0_10 = arith.constant 0 : index
    %c0_11 = arith.constant 0 : index
    %7 = vector.load %arg9[%c0_9, %c0_10, %c0_11] : memref<2x18x128xf32, #tpu.memory_space<vmem>>, vector<2x16x128xf32>
    %8 = vector.shape_cast %7 : vector<2x16x128xf32> to vector<32x128xf32>
    %9 = arith.truncf %8 : vector<32x128xf32> to vector<32x128xbf16>
    %c0_12 = arith.constant 0 : index
    %c0_13 = arith.constant 0 : index
    %c0_14 = arith.constant 0 : index
    %10 = vector.load %arg1[%c0_12, %c0_13, %c0_14] : memref<3x128x128xbf16, #tpu.memory_space<vmem>>, vector<1x128x128xbf16>
    %11 = vector.shape_cast %10 : vector<1x128x128xbf16> to vector<128x128xbf16>
    %cst_15 = arith.constant dense<0.000000e+00> : vector<32x128xf32>
    %12 = tpu.matmul %9, %11, %cst_15 {dimension_numbers = #tpu.dot_dimension_numbers<[1], [0], [0], [1], [0, 0, 1, 1], [], []>} : vector<32x128xbf16>, vector<128x128xbf16>, vector<32x128xf32> -> vector<32x128xf32>
    %13 = arith.addf %6, %12 : vector<32x128xf32>
    %c0_16 = arith.constant 0 : index
    %c1_17 = arith.constant 1 : index
    %c0_18 = arith.constant 0 : index
    %14 = vector.load %arg9[%c0_16, %c1_17, %c0_18] : memref<2x18x128xf32, #tpu.memory_space<vmem>>, vector<2x16x128xf32>
    %15 = vector.shape_cast %14 : vector<2x16x128xf32> to vector<32x128xf32>
    %16 = arith.truncf %15 : vector<32x128xf32> to vector<32x128xbf16>
    %c1_19 = arith.constant 1 : index
    %c0_20 = arith.constant 0 : index
    %c0_21 = arith.constant 0 : index
    %17 = vector.load %arg1[%c1_19, %c0_20, %c0_21] : memref<3x128x128xbf16, #tpu.memory_space<vmem>>, vector<1x128x128xbf16>
    %18 = vector.shape_cast %17 : vector<1x128x128xbf16> to vector<128x128xbf16>
    %cst_22 = arith.constant dense<0.000000e+00> : vector<32x128xf32>
    %19 = tpu.matmul %16, %18, %cst_22 {dimension_numbers = #tpu.dot_dimension_numbers<[1], [0], [0], [1], [0, 0, 1, 1], [], []>} : vector<32x128xbf16>, vector<128x128xbf16>, vector<32x128xf32> -> vector<32x128xf32>
    %20 = arith.addf %13, %19 : vector<32x128xf32>
    %c0_23 = arith.constant 0 : index
    %c2 = arith.constant 2 : index
    %c0_24 = arith.constant 0 : index
    %21 = vector.load %arg9[%c0_23, %c2, %c0_24] : memref<2x18x128xf32, #tpu.memory_space<vmem>>, vector<2x16x128xf32>
    %22 = vector.shape_cast %21 : vector<2x16x128xf32> to vector<32x128xf32>
    %23 = arith.truncf %22 : vector<32x128xf32> to vector<32x128xbf16>
    %c2_25 = arith.constant 2 : index
    %c0_26 = arith.constant 0 : index
    %c0_27 = arith.constant 0 : index
    %24 = vector.load %arg1[%c2_25, %c0_26, %c0_27] : memref<3x128x128xbf16, #tpu.memory_space<vmem>>, vector<1x128x128xbf16>
    %25 = vector.shape_cast %24 : vector<1x128x128xbf16> to vector<128x128xbf16>
    %cst_28 = arith.constant dense<0.000000e+00> : vector<32x128xf32>
    %26 = tpu.matmul %23, %25, %cst_28 {dimension_numbers = #tpu.dot_dimension_numbers<[1], [0], [0], [1], [0, 0, 1, 1], [], []>} : vector<32x128xbf16>, vector<128x128xbf16>, vector<32x128xf32> -> vector<32x128xf32>
    %27 = arith.addf %20, %26 : vector<32x128xf32>
    %cst_29 = arith.constant dense<0.000000e+00> : vector<128xf32>
    %28 = vector.multi_reduction <add>, %27, %cst_29 [0] : vector<32x128xf32> to vector<128xf32>
    %29 = vector.shape_cast %28 : vector<128xf32> to vector<1x128xf32>
    %30 = arith.mulf %27, %27 : vector<32x128xf32>
    %cst_30 = arith.constant dense<0.000000e+00> : vector<128xf32>
    %31 = vector.multi_reduction <add>, %30, %cst_30 [0] : vector<32x128xf32> to vector<128xf32>
    %32 = vector.shape_cast %31 : vector<128xf32> to vector<1x128xf32>
    %c0_31 = arith.constant 0 : index
    %c0_32 = arith.constant 0 : index
    %33 = vector.load %arg3[%c0_31, %c0_32] : memref<128x128xf32, #tpu.memory_space<vmem>>, vector<128x128xf32>
    %cst_33 = arith.constant dense<0.000000e+00> : vector<1x128xf32>
    %34 = tpu.matmul %29, %33, %cst_33 {dimension_numbers = #tpu.dot_dimension_numbers<[1], [0], [0], [1], [0, 0, 1, 1], [], []>} : vector<1x128xf32>, vector<128x128xf32>, vector<1x128xf32> -> vector<1x128xf32>
    %c0_34 = arith.constant 0 : index
    %c0_35 = arith.constant 0 : index
    %35 = vector.load %arg3[%c0_34, %c0_35] : memref<128x128xf32, #tpu.memory_space<vmem>>, vector<128x128xf32>
    %cst_36 = arith.constant dense<0.000000e+00> : vector<1x128xf32>
    %36 = tpu.matmul %32, %35, %cst_36 {dimension_numbers = #tpu.dot_dimension_numbers<[1], [0], [0], [1], [0, 0, 1, 1], [], []>} : vector<1x128xf32>, vector<128x128xf32>, vector<1x128xf32> -> vector<1x128xf32>
    %37 = arith.mulf %34, %34 : vector<1x128xf32>
    %38 = arith.subf %36, %37 : vector<1x128xf32>
    %c0_37 = arith.constant 0 : index
    %c0_38 = arith.constant 0 : index
    %39 = vector.load %arg4[%c0_37, %c0_38] : memref<1x128xf32, #tpu.memory_space<vmem>>, vector<1x128xf32>
    %cst_39 = arith.constant 9.99999974E-6 : f32
    %40 = vector.broadcast %cst_39 : f32 to vector<1x128xf32>
    %41 = arith.addf %38, %40 : vector<1x128xf32>
    %42 = math.rsqrt %41 : vector<1x128xf32>
    %43 = arith.mulf %39, %42 : vector<1x128xf32>
    %c0_40 = arith.constant 0 : index
    %c0_41 = arith.constant 0 : index
    %44 = vector.load %arg5[%c0_40, %c0_41] : memref<1x128xf32, #tpu.memory_space<vmem>>, vector<1x128xf32>
    %45 = arith.mulf %34, %43 : vector<1x128xf32>
    %46 = arith.subf %44, %45 : vector<1x128xf32>
    %47 = vector.broadcast %43 : vector<1x128xf32> to vector<32x128xf32>
    %48 = arith.mulf %27, %47 : vector<32x128xf32>
    %49 = vector.broadcast %46 : vector<1x128xf32> to vector<32x128xf32>
    %50 = arith.addf %48, %49 : vector<32x128xf32>
    %cst_42 = arith.constant 0.000000e+00 : f32
    %51 = vector.broadcast %cst_42 : f32 to vector<32x128xf32>
    %52 = arith.maximumf %50, %51 : vector<32x128xf32>
    %53 = vector.shape_cast %52 : vector<32x128xf32> to vector<2x16x128xf32>
    %c0_43 = arith.constant 0 : index
    %c1_44 = arith.constant 1 : index
    %c0_45 = arith.constant 0 : index
    %54 = vector.load %arg9[%c0_43, %c1_44, %c0_45] : memref<2x18x128xf32, #tpu.memory_space<vmem>>, vector<2x16x128xf32>
    tpu.vector_store %arg9[%c0_43, %c1_44, %c0_45], %53 {strides = array<i32>} : memref<2x18x128xf32, #tpu.memory_space<vmem>>, vector<2x16x128xf32>,
    %cst_46 = arith.constant 0.000000e+00 : f32
    %55 = vector.broadcast %cst_46 : f32 to vector<32x128xf32>
    %c0_47 = arith.constant 0 : index
    %c0_48 = arith.constant 0 : index
    %c0_49 = arith.constant 0 : index
    %56 = vector.load %arg9[%c0_47, %c0_48, %c0_49] : memref<2x18x128xf32, #tpu.memory_space<vmem>>, vector<2x16x128xf32>
    %57 = vector.shape_cast %56 : vector<2x16x128xf32> to vector<32x128xf32>
    %58 = arith.truncf %57 : vector<32x128xf32> to vector<32x128xbf16>
    %c0_50 = arith.constant 0 : index
    %c0_51 = arith.constant 0 : index
    %c0_52 = arith.constant 0 : index
    %59 = vector.load %arg2[%c0_50, %c0_51, %c0_52] : memref<3x128x128xbf16, #tpu.memory_space<vmem>>, vector<1x128x128xbf16>
    %60 = vector.shape_cast %59 : vector<1x128x128xbf16> to vector<128x128xbf16>
    %cst_53 = arith.constant dense<0.000000e+00> : vector<32x128xf32>
    %61 = tpu.matmul %58, %60, %cst_53 {dimension_numbers = #tpu.dot_dimension_numbers<[1], [0], [0], [1], [0, 0, 1, 1], [], []>} : vector<32x128xbf16>, vector<128x128xbf16>, vector<32x128xf32> -> vector<32x128xf32>
    %62 = arith.addf %55, %61 : vector<32x128xf32>
    %c0_54 = arith.constant 0 : index
    %c1_55 = arith.constant 1 : index
    %c0_56 = arith.constant 0 : index
    %63 = vector.load %arg9[%c0_54, %c1_55, %c0_56] : memref<2x18x128xf32, #tpu.memory_space<vmem>>, vector<2x16x128xf32>
    %64 = vector.shape_cast %63 : vector<2x16x128xf32> to vector<32x128xf32>
    %65 = arith.truncf %64 : vector<32x128xf32> to vector<32x128xbf16>
    %c1_57 = arith.constant 1 : index
    %c0_58 = arith.constant 0 : index
    %c0_59 = arith.constant 0 : index
    %66 = vector.load %arg2[%c1_57, %c0_58, %c0_59] : memref<3x128x128xbf16, #tpu.memory_space<vmem>>, vector<1x128x128xbf16>
    %67 = vector.shape_cast %66 : vector<1x128x128xbf16> to vector<128x128xbf16>
    %cst_60 = arith.constant dense<0.000000e+00> : vector<32x128xf32>
    %68 = tpu.matmul %65, %67, %cst_60 {dimension_numbers = #tpu.dot_dimension_numbers<[1], [0], [0], [1], [0, 0, 1, 1], [], []>} : vector<32x128xbf16>, vector<128x128xbf16>, vector<32x128xf32> -> vector<32x128xf32>
    %69 = arith.addf %62, %68 : vector<32x128xf32>
    %c0_61 = arith.constant 0 : index
    %c2_62 = arith.constant 2 : index
    %c0_63 = arith.constant 0 : index
    %70 = vector.load %arg9[%c0_61, %c2_62, %c0_63] : memref<2x18x128xf32, #tpu.memory_space<vmem>>, vector<2x16x128xf32>
    %71 = vector.shape_cast %70 : vector<2x16x128xf32> to vector<32x128xf32>
    %72 = arith.truncf %71 : vector<32x128xf32> to vector<32x128xbf16>
    %c2_64 = arith.constant 2 : index
    %c0_65 = arith.constant 0 : index
    %c0_66 = arith.constant 0 : index
    %73 = vector.load %arg2[%c2_64, %c0_65, %c0_66] : memref<3x128x128xbf16, #tpu.memory_space<vmem>>, vector<1x128x128xbf16>
    %74 = vector.shape_cast %73 : vector<1x128x128xbf16> to vector<128x128xbf16>
    %cst_67 = arith.constant dense<0.000000e+00> : vector<32x128xf32>
    %75 = tpu.matmul %72, %74, %cst_67 {dimension_numbers = #tpu.dot_dimension_numbers<[1], [0], [0], [1], [0, 0, 1, 1], [], []>} : vector<32x128xbf16>, vector<128x128xbf16>, vector<32x128xf32> -> vector<32x128xf32>
    %76 = arith.addf %69, %75 : vector<32x128xf32>
    %cst_68 = arith.constant dense<0.000000e+00> : vector<128xf32>
    %77 = vector.multi_reduction <add>, %76, %cst_68 [0] : vector<32x128xf32> to vector<128xf32>
    %78 = vector.shape_cast %77 : vector<128xf32> to vector<1x128xf32>
    %79 = arith.mulf %76, %76 : vector<32x128xf32>
    %cst_69 = arith.constant dense<0.000000e+00> : vector<128xf32>
    %80 = vector.multi_reduction <add>, %79, %cst_69 [0] : vector<32x128xf32> to vector<128xf32>
    %81 = vector.shape_cast %80 : vector<128xf32> to vector<1x128xf32>
    %c0_70 = arith.constant 0 : index
    %c0_71 = arith.constant 0 : index
    %82 = vector.load %arg3[%c0_70, %c0_71] : memref<128x128xf32, #tpu.memory_space<vmem>>, vector<128x128xf32>
    %cst_72 = arith.constant dense<0.000000e+00> : vector<1x128xf32>
    %83 = tpu.matmul %78, %82, %cst_72 {dimension_numbers = #tpu.dot_dimension_numbers<[1], [0], [0], [1], [0, 0, 1, 1], [], []>} : vector<1x128xf32>, vector<128x128xf32>, vector<1x128xf32> -> vector<1x128xf32>
    %c0_73 = arith.constant 0 : index
    %c0_74 = arith.constant 0 : index
    %84 = vector.load %arg3[%c0_73, %c0_74] : memref<128x128xf32, #tpu.memory_space<vmem>>, vector<128x128xf32>
    %cst_75 = arith.constant dense<0.000000e+00> : vector<1x128xf32>
    %85 = tpu.matmul %81, %84, %cst_75 {dimension_numbers = #tpu.dot_dimension_numbers<[1], [0], [0], [1], [0, 0, 1, 1], [], []>} : vector<1x128xf32>, vector<128x128xf32>, vector<1x128xf32> -> vector<1x128xf32>
    %86 = arith.mulf %83, %83 : vector<1x128xf32>
    %87 = arith.subf %85, %86 : vector<1x128xf32>
    %c0_76 = arith.constant 0 : index
    %c0_77 = arith.constant 0 : index
    %88 = vector.load %arg6[%c0_76, %c0_77] : memref<1x128xf32, #tpu.memory_space<vmem>>, vector<1x128xf32>
    %cst_78 = arith.constant 9.99999974E-6 : f32
    %89 = vector.broadcast %cst_78 : f32 to vector<1x128xf32>
    %90 = arith.addf %87, %89 : vector<1x128xf32>
    %91 = math.rsqrt %90 : vector<1x128xf32>
    %92 = arith.mulf %88, %91 : vector<1x128xf32>
    %c0_79 = arith.constant 0 : index
    %c0_80 = arith.constant 0 : index
    %93 = vector.load %arg7[%c0_79, %c0_80] : memref<1x128xf32, #tpu.memory_space<vmem>>, vector<1x128xf32>
    %94 = arith.mulf %83, %92 : vector<1x128xf32>
    %95 = arith.subf %93, %94 : vector<1x128xf32>
    %96 = vector.broadcast %92 : vector<1x128xf32> to vector<32x128xf32>
    %97 = arith.mulf %76, %96 : vector<32x128xf32>
    %98 = vector.broadcast %95 : vector<1x128xf32> to vector<32x128xf32>
    %99 = arith.addf %97, %98 : vector<32x128xf32>
    %100 = arith.addf %99, %3 : vector<32x128xf32>
    %cst_81 = arith.constant 0.000000e+00 : f32
    %101 = vector.broadcast %cst_81 : f32 to vector<32x128xf32>
    %102 = arith.maximumf %100, %101 : vector<32x128xf32>
    %c0_82 = arith.constant 0 : index
    %c0_83 = arith.constant 0 : index
    %103 = vector.load %arg8[%c0_82, %c0_83] : memref<32x128xf32, #tpu.memory_space<vmem>>, vector<32x128xf32>
    tpu.vector_store %arg8[%c0_82, %c0_83], %102 {strides = array<i32>} : memref<32x128xf32, #tpu.memory_space<vmem>>, vector<32x128xf32>,
    return
  }
}

</mosaic_0001>

<llo_original>
// kernel: tile.23
$region0: #{tile.23}
  #allocation0 [shape = 's32[1]{0}', space=sflag, size = 0x4, scoped, tag = 'scoped memory for tile.23']
  %s0 = inlined_call_operand.vmem [shape: f32[8], index: 0, kind: input, shape index: {}]
  %s1 = inlined_call_operand.vmem [shape: f32[16,8], index: 1, kind: output, shape index: {}]
  // Predicated region
  $region2: #{tile.23} parent=0 // pred_check
    _
  $region3: #{tile.23} parent=0 // pred_check_branch
    %3 = sbr.rel (0) target = $region5
  $region4: #{tile.23} parent=0 // pred_region
    _
  $region5: #{tile.23} parent=0 // pred_fallthru
    _
  %v4 = vld [vmem:[%s0] ss:$0 sm:$0xff]
  %5 = vst [vmem:[%s1] sm:$0xff] %v4
  %s6 = scalar_lea.vmem %s1, 8
  %7 = vst [vmem:[%s6] sm:$0xff] %v4

// kernel: tile.24
$region0: #{tile.24}
  %s0 = inlined_call_operand.vmem [shape: f32[16,8], index: 0, kind: input, shape index: {}]
  %s1 = inlined_call_operand.vmem [shape: f32[1,128], index: 1, kind: output, shape index: {}]
  $region1: #{tile.24} parent=0
    #allocation0 [shape = 'u8[4096]{0}', space=vmem, size = 0x1000, scoped, tag = 'scoped mem for output reshape']
    %v2 = vld [vmem:[%s0] sm:$0x1]
    %vm3 = vcmask 64512
    %4 = vst.msk [vmem:[#allocation0] sm:$0x1] %vm3, %v2
    %s5 = scalar_lea.vmem %s0, 15
    %v6 = vld [vmem:[%s5] sm:$0x1]
    %7 = vrot.lane.b32.xlu0 %v6, 120
    %v8 = vpop.permute.xlu0 %7
    %vm9 = vcmask 1048512
    %10 = vst.msk [vmem:[#allocation0] sm:$0x1] %vm9, %v8
    %s11 = scalar_lea.vmem %s0, 14
    %v12 = vld [vmem:[%s11] sm:$0x1]
    %13 = vrot.lane.b32.xlu0 %v12, 112
    %v14 = vpop.permute.xlu0 %13
    %vm15 = vcmask 982912
    %16 = vst.msk [vmem:[#allocation0] sm:$0x1] %vm15, %v14
    %s17 = scalar_lea.vmem %s0, 13
    %v18 = vld [vmem:[%s17] sm:$0x1]
    %19 = vrot.lane.b32.xlu0 %v18, 104
    %v20 = vpop.permute.xlu0 %19
    %vm21 = vcmask 917312
    %22 = vst.msk [vmem:[#allocation0] sm:$0x1] %vm21, %v20
    %s23 = scalar_lea.vmem %s0, 12
    %v24 = vld [vmem:[%s23] sm:$0x1]
    %25 = vrot.lane.b32.xlu0 %v24, 96
    %v26 = vpop.permute.xlu0 %25
    %vm27 = vcmask 851712
    %28 = vst.msk [vmem:[#allocation0] sm:$0x1] %vm27, %v26
    %s29 = scalar_lea.vmem %s0, 11
    %v30 = vld [vmem:[%s29] sm:$0x1]
    %31 = vrot.lane.b32.xlu0 %v30, 88
    %v32 = vpop.permute.xlu0 %31
    %vm33 = vcmask 786112
    %34 = vst.msk [vmem:[#allocation0] sm:$0x1] %vm33, %v32
    %s35 = scalar_lea.vmem %s0, 10
    %v36 = vld [vmem:[%s35] sm:$0x1]
    %37 = vrot.lane.b32.xlu0 %v36, 80
    %v38 = vpop.permute.xlu0 %37
    %vm39 = vcmask 720512
    %40 = vst.msk [vmem:[#allocation0] sm:$0x1] %vm39, %v38
    %s41 = scalar_lea.vmem %s0, 9
    %v42 = vld [vmem:[%s41] sm:$0x1]
    %43 = vrot.lane.b32.xlu0 %v42, 72
    %v44 = vpop.permute.xlu0 %43
    %vm45 = vcmask 654912
    %46 = vst.msk [vmem:[#allocation0] sm:$0x1] %vm45, %v44
    %s47 = scalar_lea.vmem %s0, 8
    %v48 = vld [vmem:[%s47] sm:$0x1]
    %49 = vrot.lane.b32.xlu0 %v48, 64
    %v50 = vpop.permute.xlu0 %49
    %vm51 = vcmask 589312
    %52 = vst.msk [vmem:[#allocation0] sm:$0x1] %vm51, %v50
    %s53 = scalar_lea.vmem %s0, 7
    %v54 = vld [vmem:[%s53] sm:$0x1]
    %55 = vrot.lane.b32.xlu0 %v54, 56
    %v56 = vpop.permute.xlu0 %55
    %vm57 = vcmask 523712
    %58 = vst.msk [vmem:[#allocation0] sm:$0x1] %vm57, %v56
    %s59 = scalar_lea.vmem %s0, 6
    %v60 = vld [vmem:[%s59] sm:$0x1]
    %61 = vrot.lane.b32.xlu0 %v60, 48
    %v62 = vpop.permute.xlu0 %61
    %vm63 = vcmask 458112
    %64 = vst.msk [vmem:[#allocation0] sm:$0x1] %vm63, %v62
    %s65 = scalar_lea.vmem %s0, 5
    %v66 = vld [vmem:[%s65] sm:$0x1]
    %67 = vrot.lane.b32.xlu0 %v66, 40
    %v68 = vpop.permute.xlu0 %67
    %vm69 = vcmask 392512
    %70 = vst.msk [vmem:[#allocation0] sm:$0x1] %vm69, %v68
    %s71 = scalar_lea.vmem %s0, 4
    %v72 = vld [vmem:[%s71] sm:$0x1]
    %73 = vrot.lane.b32.xlu0 %v72, 32
    %v74 = vpop.permute.xlu0 %73
    %vm75 = vcmask 326912
    %76 = vst.msk [vmem:[#allocation0] sm:$0x1] %vm75, %v74
    %s77 = scalar_lea.vmem %s0, 3
    %v78 = vld [vmem:[%s77] sm:$0x1]
    %79 = vrot.lane.b32.xlu0 %v78, 24
    %v80 = vpop.permute.xlu0 %79
    %vm81 = vcmask 261312
    %82 = vst.msk [vmem:[#allocation0] sm:$0x1] %vm81, %v80
    %s83 = scalar_lea.vmem %s0, 2
    %v84 = vld [vmem:[%s83] sm:$0x1]
    %85 = vrot.lane.b32.xlu0 %v84, 16
    %v86 = vpop.permute.xlu0 %85
    %vm87 = vcmask 195712
    %88 = vst.msk [vmem:[#allocation0] sm:$0x1] %vm87, %v86
    %s89 = scalar_lea.vmem %s0, 1
    %v90 = vld [vmem:[%s89] sm:$0x1]
    %91 = vrot.lane.b32.xlu0 %v90, 8
    %v92 = vpop.permute.xlu0 %91
    %vm93 = vcmask 130112
    %94 = vst.msk [vmem:[#allocation0] sm:$0x1] %vm93, %v92
    %s96 = sshllo.u32 0, 1
    %v98 = vld [vmem:[#allocation0] sm:%s96]
    %s99 = sshllo.u32 0, 1
    %100 = vst [vmem:[%s1] sm:%s99] %v98

// kernel: residual_block.1
$region0: #{residual_block.1}
  #allocation0 [shape = 'u32[]', space=smem, size = 0x4, offset = 0x4, fixed_abs, tag = 'smem constant byte address 0x4 - core index']
  #allocation1 [shape = 'u32[144,128]{1,0:T(1,128)}', space=vmem, size = 0x12000, scoped, tag = 'internal scratch']
  #allocation2 [shape = 'f32[2,18,128]{2,1,0:T(8,128)}', space=vmem, size = 0x6000, scoped, tag = 'scratch operand']
  %s0 = inlined_call_operand.vmem [shape: f32[32,128], index: 0, kind: input, shape index: {}]
  %s1 = inlined_call_operand.vmem [shape: bf16[3,128,128], index: 1, kind: input, shape index: {}]
  %s2 = inlined_call_operand.vmem [shape: bf16[3,128,128], index: 2, kind: input, shape index: {}]
  %s3 = inlined_call_operand.vmem [shape: f32[128,128], index: 3, kind: input, shape index: {}]
  %s4 = inlined_call_operand.vmem [shape: f32[1,128], index: 4, kind: input, shape index: {}]
  %s5 = inlined_call_operand.vmem [shape: f32[1,128], index: 5, kind: input, shape index: {}]
  %s6 = inlined_call_operand.vmem [shape: f32[1,128], index: 6, kind: input, shape index: {}]
  %s7 = inlined_call_operand.vmem [shape: f32[1,128], index: 7, kind: input, shape index: {}]
  %s8 = inlined_call_operand.vmem [shape: f32[32,128], index: 8, kind: output, shape index: {}]
  %s9 = sld [smem:[#allocation0]]
  $region42: #{residual_block.1} parent=0
    _
  %s11 = ssub.s32 1, %s9
  %s12 = scalar_select 0, %s11, %s9
  // Predicated region
  $region2: #{residual_block.1} parent=0 // pred_check
    _
  $region3: #{residual_block.1} parent=0 // pred_check_branch
    %14 = sbr.rel (0) target = $region5
  $region4: #{residual_block.1} parent=0 // pred_region
    _
  $region5: #{residual_block.1} parent=0 // pred_fallthru
    _
  // Predicated region
  $region6: #{residual_block.1} parent=0 // pred_check
    _
  $region7: #{residual_block.1} parent=0 // pred_check_branch
    %16 = sbr.rel (0) target = $region9
  $region8: #{residual_block.1} parent=0 // pred_region
    _
  $region9: #{residual_block.1} parent=0 // pred_fallthru
    _
  // Predicated region
  $region10: #{residual_block.1} parent=0 // pred_check
    _
  $region11: #{residual_block.1} parent=0 // pred_check_branch
    %18 = sbr.rel (0) target = $region13
  $region12: #{residual_block.1} parent=0 // pred_region
    _
  $region13: #{residual_block.1} parent=0 // pred_fallthru
    _
  // Predicated region
  $region14: #{residual_block.1} parent=0 // pred_check
    _
  $region15: #{residual_block.1} parent=0 // pred_check_branch
    %20 = sbr.rel (0) target = $region17
  $region16: #{residual_block.1} parent=0 // pred_region
    _
  $region17: #{residual_block.1} parent=0 // pred_fallthru
    _
  // Predicated region
  $region18: #{residual_block.1} parent=0 // pred_check
    _
  $region19: #{residual_block.1} parent=0 // pred_check_branch
    %22 = sbr.rel (0) target = $region21
  $region20: #{residual_block.1} parent=0 // pred_region
    _
  $region21: #{residual_block.1} parent=0 // pred_fallthru
    _
  // Predicated region
  $region22: #{residual_block.1} parent=0 // pred_check
    _
  $region23: #{residual_block.1} parent=0 // pred_check_branch
    %24 = sbr.rel (0) target = $region25
  $region24: #{residual_block.1} parent=0 // pred_region
    _
  $region25: #{residual_block.1} parent=0 // pred_fallthru
    _
  // Predicated region
  $region26: #{residual_block.1} parent=0 // pred_check
    _
  $region27: #{residual_block.1} parent=0 // pred_check_branch
    %26 = sbr.rel (0) target = $region29
  $region28: #{residual_block.1} parent=0 // pred_region
    _
  $region29: #{residual_block.1} parent=0 // pred_fallthru
    _
  // Predicated region
  $region30: #{residual_block.1} parent=0 // pred_check
    _
  $region31: #{residual_block.1} parent=0 // pred_check_branch
    %28 = sbr.rel (0) target = $region33
  $region32: #{residual_block.1} parent=0 // pred_region
    _
  $region33: #{residual_block.1} parent=0 // pred_fallthru
    _
  %30 = vst [vmem:[#allocation2] sm:$0x1] 0.0
  %31 = vst [vmem:[#allocation2 + $0x18] sm:$0x1] 0.0
  %32 = vst [vmem:[#allocation2 + $0x11] sm:$0x1] 0.0
  %33 = vst [vmem:[#allocation2 + $0x29] sm:$0x1] 0.0
  %v34 = vld [vmem:[%s0] sm:$0xff]
  %v35 = vld [vmem:[%s0 + $0x8] sm:$0xff]
  %v36 = vld [vmem:[%s0 + $0x10] sm:$0xff]
  %v37 = vld [vmem:[%s0 + $0x18] sm:$0xff]
  %38 = vst [vmem:[#allocation2 + $0x1] sm:$0xff] %v34
  %39 = vst [vmem:[#allocation2 + $0x9] sm:$0xff] %v35
  %40 = vst [vmem:[#allocation2 + $0x19] sm:$0xff] %v36
  %41 = vst [vmem:[#allocation2 + $0x21] sm:$0xff] %v37
  %v42 = vld [vmem:[#allocation2] sm:$0xff]
  %v43 = vld [vmem:[#allocation2 + $0x8] sm:$0xff]
  %v44 = vld [vmem:[#allocation2 + $0x18] sm:$0xff]
  %v45 = vld [vmem:[#allocation2 + $0x20] sm:$0xff]
  %v46 = vpack.c.bf16 %v43, %v42
  %v47 = vpack.c.bf16 %v45, %v44
  %v48 = vld [vmem:[%s1] sm:$0xf]
  %v49 = vld [vmem:[%s1 + $0x4] sm:$0xf]
  %v50 = vld [vmem:[%s1 + $0x8] sm:$0xf]
  %v51 = vld [vmem:[%s1 + $0xc] sm:$0xf]
  %v52 = vld [vmem:[%s1 + $0x10] sm:$0xf]
  %v53 = vld [vmem:[%s1 + $0x14] sm:$0xf]
  %v54 = vld [vmem:[%s1 + $0x18] sm:$0xf]
  %v55 = vld [vmem:[%s1 + $0x1c] sm:$0xf]
  %v56 = vld [vmem:[%s1 + $0x20] sm:$0xf]
  %v57 = vld [vmem:[%s1 + $0x24] sm:$0xf]
  %v58 = vld [vmem:[%s1 + $0x28] sm:$0xf]
  %v59 = vld [vmem:[%s1 + $0x2c] sm:$0xf]
  %v60 = vld [vmem:[%s1 + $0x30] sm:$0xf]
  %v61 = vld [vmem:[%s1 + $0x34] sm:$0xf]
  %v62 = vld [vmem:[%s1 + $0x38] sm:$0xf]
  %v63 = vld [vmem:[%s1 + $0x3c] sm:$0xf]
  %v64 = vld [vmem:[#allocation2 + $0x1] sm:$0xff]
  %v65 = vld [vmem:[#allocation2 + $0x9] sm:$0xff]
  %v66 = vld [vmem:[#allocation2 + $0x19] sm:$0xff]
  %v67 = vld [vmem:[#allocation2 + $0x21] sm:$0xff]
  %v68 = vpack.c.bf16 %v65, %v64
  %v69 = vpack.c.bf16 %v67, %v66
  %s70 = scalar_lea.vmem %s1, 64
  %v71 = vld [vmem:[%s70] sm:$0xf]
  %v72 = vld [vmem:[%s70 + $0x4] sm:$0xf]
  %v73 = vld [vmem:[%s70 + $0x8] sm:$0xf]
  %v74 = vld [vmem:[%s70 + $0xc] sm:$0xf]
  %v75 = vld [vmem:[%s70 + $0x10] sm:$0xf]
  %v76 = vld [vmem:[%s70 + $0x14] sm:$0xf]
  %v77 = vld [vmem:[%s70 + $0x18] sm:$0xf]
  %v78 = vld [vmem:[%s70 + $0x1c] sm:$0xf]
  %v79 = vld [vmem:[%s70 + $0x20] sm:$0xf]
  %v80 = vld [vmem:[%s70 + $0x24] sm:$0xf]
  %v81 = vld [vmem:[%s70 + $0x28] sm:$0xf]
  %v82 = vld [vmem:[%s70 + $0x2c] sm:$0xf]
  %v83 = vld [vmem:[%s70 + $0x30] sm:$0xf]
  %v84 = vld [vmem:[%s70 + $0x34] sm:$0xf]
  %v85 = vld [vmem:[%s70 + $0x38] sm:$0xf]
  %v86 = vld [vmem:[%s70 + $0x3c] sm:$0xf]
  %v103 = vunpack.c.l.b16 %v71
  %v104 = vunpack.c.l.b16 %v72
  %v105 = vunpack.c.l.b16 %v73
  %v106 = vunpack.c.l.b16 %v74
  %v107 = vunpack.c.l.b16 %v75
  %v108 = vunpack.c.l.b16 %v76
  %v109 = vunpack.c.l.b16 %v77
  %v110 = vunpack.c.l.b16 %v78
  %v111 = vunpack.c.l.b16 %v79
  %v112 = vunpack.c.l.b16 %v80
  %v113 = vunpack.c.l.b16 %v81
  %v114 = vunpack.c.l.b16 %v82
  %v115 = vunpack.c.l.b16 %v83
  %v116 = vunpack.c.l.b16 %v84
  %v117 = vunpack.c.l.b16 %v85
  %v118 = vunpack.c.l.b16 %v86
  %v119 = vpack.c.b16 %v104, %v103
  %v120 = vpack.c.b16 %v106, %v105
  %v121 = vpack.c.b16 %v108, %v107
  %v122 = vpack.c.b16 %v110, %v109
  %v123 = vpack.c.b16 %v112, %v111
  %v124 = vpack.c.b16 %v114, %v113
  %v125 = vpack.c.b16 %v116, %v115
  %v126 = vpack.c.b16 %v118, %v117
  %135 = vmatprep.subr.bf16.mxu0 0
  %136 = vmatpush1.bf16.msra.mxu0 %v119
  %137 = vmatprep.subr.bf16.mxu0 0
  %138 = vmatpush1.bf16.msra.mxu0 %v120
  %139 = vmatprep.subr.bf16.mxu0 0
  %140 = vmatpush1.bf16.msra.mxu0 %v121
  %141 = vmatprep.subr.bf16.mxu0 0
  %142 = vmatpush1.bf16.msra.mxu0 %v122
  %143 = vmatprep.subr.bf16.mxu0 0
  %144 = vmatpush1.bf16.msra.mxu0 %v123
  %145 = vmatprep.subr.bf16.mxu0 0
  %146 = vmatpush1.bf16.msra.mxu0 %v124
  %147 = vmatprep.subr.bf16.mxu0 0
  %148 = vmatpush1.bf16.msra.mxu0 %v125
  %149 = vmatprep.subr.bf16.mxu0 0
  %150 = vmatpush1.bf16.msra.mxu0 %v126
  %151 = vmatprep.subr.bf16.mxu0 0
  %152 = vmatpush1.bf16.msra.mxu0 0
  %153 = vmatprep.subr.bf16.mxu0 0
  %154 = vmatpush1.bf16.msra.mxu0 0
  %155 = vmatprep.subr.bf16.mxu0 0
  %156 = vmatpush1.bf16.msra.mxu0 0
  %157 = vmatprep.subr.bf16.mxu0 0
  %158 = vmatpush1.bf16.msra.mxu0 0
  %159 = vmatprep.subr.bf16.mxu0 0
  %160 = vmatpush1.bf16.msra.mxu0 0
  %161 = vmatprep.subr.bf16.mxu0 0
  %162 = vmatpush1.bf16.msra.mxu0 0
  %163 = vmatprep.subr.bf16.mxu0 0
  %164 = vmatpush1.bf16.msra.mxu0 0
  %165 = vmatprep.subr.bf16.mxu0 0
  %166 = vmatpush1.bf16.msra.mxu0 0
  %167 = vmatprep.mubr.bf16.mxu0 0
  %168 = vmatmul.mubr.bf16.gmra.mrb[0].mxu0 %v68
  %v169 = vpop.f32.mrb[0].mxu0
  %v170 = vadd.f32 0.0, %v169
  %v171 = vpop.f32.mrb[0].mxu0
  %v172 = vpop.f32.mrb[0].mxu0
  %v173 = vadd.f32 0.0, %v172
  %v174 = vpop.f32.mrb[0].mxu0
  %175 = vmatprep.mubr.bf16.mxu0 0
  %176 = vmatmul.mubr.bf16.gmra.mrb[0].mxu0 %v69
  %v177 = vpop.f32.mrb[0].mxu0
  %v178 = vadd.f32 0.0, %v177
  %v179 = vpop.f32.mrb[0].mxu0
  %v180 = vpop.f32.mrb[0].mxu0
  %v181 = vadd.f32 0.0, %v180
  %v182 = vpop.f32.mrb[0].mxu0
  %183 = vdwg.mxu0
  %v200 = vunpack.c.l.b16 %v48
  %v201 = vunpack.c.l.b16 %v49
  %v202 = vunpack.c.l.b16 %v50
  %v203 = vunpack.c.l.b16 %v51
  %v204 = vunpack.c.l.b16 %v52
  %v205 = vunpack.c.l.b16 %v53
  %v206 = vunpack.c.l.b16 %v54
  %v207 = vunpack.c.l.b16 %v55
  %v208 = vunpack.c.l.b16 %v56
  %v209 = vunpack.c.l.b16 %v57
  %v210 = vunpack.c.l.b16 %v58
  %v211 = vunpack.c.l.b16 %v59
  %v212 = vunpack.c.l.b16 %v60
  %v213 = vunpack.c.l.b16 %v61
  %v214 = vunpack.c.l.b16 %v62
  %v215 = vunpack.c.l.b16 %v63
  %v216 = vpack.c.b16 %v201, %v200
  %v217 = vpack.c.b16 %v203, %v202
  %v218 = vpack.c.b16 %v205, %v204
  %v219 = vpack.c.b16 %v207, %v206
  %v220 = vpack.c.b16 %v209, %v208
  %v221 = vpack.c.b16 %v211, %v210
  %v222 = vpack.c.b16 %v213, %v212
  %v223 = vpack.c.b16 %v215, %v214
  %232 = vmatprep.subr.bf16.mxu0 0
  %233 = vmatpush1.bf16.msra.mxu0 %v216
  %234 = vmatprep.subr.bf16.mxu0 0
  %235 = vmatpush1.bf16.msra.mxu0 %v217
  %236 = vmatprep.subr.bf16.mxu0 0
  %237 = vmatpush1.bf16.msra.mxu0 %v218
  %238 = vmatprep.subr.bf16.mxu0 0
  %239 = vmatpush1.bf16.msra.mxu0 %v219
  %240 = vmatprep.subr.bf16.mxu0 0
  %241 = vmatpush1.bf16.msra.mxu0 %v220
  %242 = vmatprep.subr.bf16.mxu0 0
  %243 = vmatpush1.bf16.msra.mxu0 %v221
  %244 = vmatprep.subr.bf16.mxu0 0
  %245 = vmatpush1.bf16.msra.mxu0 %v222
  %246 = vmatprep.subr.bf16.mxu0 0
  %247 = vmatpush1.bf16.msra.mxu0 %v223
  %248 = vmatprep.subr.bf16.mxu0 0
  %249 = vmatpush1.bf16.msra.mxu0 0
  %250 = vmatprep.subr.bf16.mxu0 0
  %251 = vmatpush1.bf16.msra.mxu0 0
  %252 = vmatprep.subr.bf16.mxu0 0
  %253 = vmatpush1.bf16.msra.mxu0 0
  %254 = vmatprep.subr.bf16.mxu0 0
  %255 = vmatpush1.bf16.msra.mxu0 0
  %256 = vmatprep.subr.bf16.mxu0 0
  %257 = vmatpush1.bf16.msra.mxu0 0
  %258 = vmatprep.subr.bf16.mxu0 0
  %259 = vmatpush1.bf16.msra.mxu0 0
  %260 = vmatprep.subr.bf16.mxu0 0
  %261 = vmatpush1.bf16.msra.mxu0 0
  %262 = vmatprep.subr.bf16.mxu0 0
  %263 = vmatpush1.bf16.msra.mxu0 0
  %264 = vmatprep.mubr.bf16.mxu0 0
  %265 = vmatmul.mubr.bf16.gmra.mrb[0].mxu0 %v46
  %v266 = vpop.f32.mrb[0].mxu0
  %v267 = vadd.f32 %v170, %v266
  %v268 = vpop.f32.mrb[0].mxu0
  %v269 = vpop.f32.mrb[0].mxu0
  %v270 = vadd.f32 %v173, %v269
  %v271 = vpop.f32.mrb[0].mxu0
  %272 = vmatprep.mubr.bf16.mxu0 0
  %273 = vmatmul.mubr.bf16.gmra.mrb[0].mxu0 %v47
  %v274 = vpop.f32.mrb[0].mxu0
  %v275 = vadd.f32 %v178, %v274
  %v276 = vpop.f32.mrb[0].mxu0
  %v277 = vpop.f32.mrb[0].mxu0
  %v278 = vadd.f32 %v181, %v277
  %v279 = vpop.f32.mrb[0].mxu0
  %280 = vdwg.mxu0
  %v281 = vld [vmem:[#allocation2 + $0x2] sm:$0xff]
  %v282 = vld [vmem:[#allocation2 + $0xa] sm:$0xff]
  %v283 = vld [vmem:[#allocation2 + $0x1a] sm:$0xff]
  %v284 = vld [vmem:[#allocation2 + $0x22] sm:$0xff]
  %v285 = vpack.c.bf16 %v282, %v281
  %v286 = vpack.c.bf16 %v284, %v283
  %s287 = scalar_lea.vmem %s1, 128
  %v288 = vld [vmem:[%s287] sm:$0xf]
  %v289 = vld [vmem:[%s287 + $0x4] sm:$0xf]
  %v290 = vld [vmem:[%s287 + $0x8] sm:$0xf]
  %v291 = vld [vmem:[%s287 + $0xc] sm:$0xf]
  %v292 = vld [vmem:[%s287 + $0x10] sm:$0xf]
  %v293 = vld [vmem:[%s287 + $0x14] sm:$0xf]
  %v294 = vld [vmem:[%s287 + $0x18] sm:$0xf]
  %v295 = vld [vmem:[%s287 + $0x1c] sm:$0xf]
  %v296 = vld [vmem:[%s287 + $0x20] sm:$0xf]
  %v297 = vld [vmem:[%s287 + $0x24] sm:$0xf]
  %v298 = vld [vmem:[%s287 + $0x28] sm:$0xf]
  %v299 = vld [vmem:[%s287 + $0x2c] sm:$0xf]
  %v300 = vld [vmem:[%s287 + $0x30] sm:$0xf]
  %v301 = vld [vmem:[%s287 + $0x34] sm:$0xf]
  %v302 = vld [vmem:[%s287 + $0x38] sm:$0xf]
  %v303 = vld [vmem:[%s287 + $0x3c] sm:$0xf]
  %v320 = vunpack.c.l.b16 %v288
  %v321 = vunpack.c.l.b16 %v289
  %v322 = vunpack.c.l.b16 %v290
  %v323 = vunpack.c.l.b16 %v291
  %v324 = vunpack.c.l.b16 %v292
  %v325 = vunpack.c.l.b16 %v293
  %v326 = vunpack.c.l.b16 %v294
  %v327 = vunpack.c.l.b16 %v295
  %v328 = vunpack.c.l.b16 %v296
  %v329 = vunpack.c.l.b16 %v297
  %v330 = vunpack.c.l.b16 %v298
  %v331 = vunpack.c.l.b16 %v299
  %v332 = vunpack.c.l.b16 %v300
  %v333 = vunpack.c.l.b16 %v301
  %v334 = vunpack.c.l.b16 %v302
  %v335 = vunpack.c.l.b16 %v303
  %v336 = vpack.c.b16 %v321, %v320
  %v337 = vpack.c.b16 %v323, %v322
  %v338 = vpack.c.b16 %v325, %v324
  %v339 = vpack.c.b16 %v327, %v326
  %v340 = vpack.c.b16 %v329, %v328
  %v341 = vpack.c.b16 %v331, %v330
  %v342 = vpack.c.b16 %v333, %v332
  %v343 = vpack.c.b16 %v335, %v334
  %352 = vmatprep.subr.bf16.mxu0 0
  %353 = vmatpush1.bf16.msra.mxu0 %v336
  %354 = vmatprep.subr.bf16.mxu0 0
  %355 = vmatpush1.bf16.msra.mxu0 %v337
  %356 = vmatprep.subr.bf16.mxu0 0
  %357 = vmatpush1.bf16.msra.mxu0 %v338
  %358 = vmatprep.subr.bf16.mxu0 0
  %359 = vmatpush1.bf16.msra.mxu0 %v339
  %360 = vmatprep.subr.bf16.mxu0 0
  %361 = vmatpush1.bf16.msra.mxu0 %v340
  %362 = vmatprep.subr.bf16.mxu0 0
  %363 = vmatpush1.bf16.msra.mxu0 %v341
  %364 = vmatprep.subr.bf16.mxu0 0
  %365 = vmatpush1.bf16.msra.mxu0 %v342
  %366 = vmatprep.subr.bf16.mxu0 0
  %367 = vmatpush1.bf16.msra.mxu0 %v343
  %368 = vmatprep.subr.bf16.mxu0 0
  %369 = vmatpush1.bf16.msra.mxu0 0
  %370 = vmatprep.subr.bf16.mxu0 0
  %371 = vmatpush1.bf16.msra.mxu0 0
  %372 = vmatprep.subr.bf16.mxu0 0
  %373 = vmatpush1.bf16.msra.mxu0 0
  %374 = vmatprep.subr.bf16.mxu0 0
  %375 = vmatpush1.bf16.msra.mxu0 0
  %376 = vmatprep.subr.bf16.mxu0 0
  %377 = vmatpush1.bf16.msra.mxu0 0
  %378 = vmatprep.subr.bf16.mxu0 0
  %379 = vmatpush1.bf16.msra.mxu0 0
  %380 = vmatprep.subr.bf16.mxu0 0
  %381 = vmatpush1.bf16.msra.mxu0 0
  %382 = vmatprep.subr.bf16.mxu0 0
  %383 = vmatpush1.bf16.msra.mxu0 0
  %384 = vmatprep.mubr.bf16.mxu0 0
  %385 = vmatmul.mubr.bf16.gmra.mrb[0].mxu0 %v285
  %v386 = vpop.f32.mrb[0].mxu0
  %v387 = vadd.f32 0.0, %v386
  %v388 = vpop.f32.mrb[0].mxu0
  %v389 = vpop.f32.mrb[0].mxu0
  %v390 = vadd.f32 0.0, %v389
  %v391 = vpop.f32.mrb[0].mxu0
  %392 = vmatprep.mubr.bf16.mxu0 0
  %393 = vmatmul.mubr.bf16.gmra.mrb[0].mxu0 %v286
  %v394 = vpop.f32.mrb[0].mxu0
  %v395 = vadd.f32 0.0, %v394
  %v396 = vpop.f32.mrb[0].mxu0
  %v397 = vpop.f32.mrb[0].mxu0
  %v398 = vadd.f32 0.0, %v397
  %v399 = vpop.f32.mrb[0].mxu0
  %400 = vdwg.mxu0
  %v401 = vadd.f32 %v267, %v387
  %v402 = vadd.f32 %v270, %v390
  %v403 = vadd.f32 %v275, %v395
  %v404 = vadd.f32 %v278, %v398
  %v405 = vadd.f32 %v401, %v402
  %v406 = vadd.f32 %v405, %v403
  %v407 = vadd.f32 %v406, %v404
  %v408 = vrot.slane %v407, 4
  %v409 = vadd.f32 %v407, %v408
  %v410 = vrot.slane %v409, 2
  %v411 = vadd.f32 %v409, %v410
  %v412 = vrot.slane %v411, 1
  %v413 = vadd.f32 %v411, %v412
  %v414 = vmul.f32 %v401, %v401
  %v415 = vmul.f32 %v402, %v402
  %v416 = vmul.f32 %v403, %v403
  %v417 = vmul.f32 %v404, %v404
  %v418 = vadd.f32 %v414, %v415
  %v419 = vadd.f32 %v418, %v416
  %v420 = vadd.f32 %v419, %v417
  %v421 = vrot.slane %v420, 4
  %v422 = vadd.f32 %v420, %v421
  %v423 = vrot.slane %v422, 2
  %v424 = vadd.f32 %v422, %v423
  %v425 = vrot.slane %v424, 1
  %v426 = vadd.f32 %v424, %v425
  %v427 = vld [vmem:[%s3] sm:$0xff]
  %v428 = vld [vmem:[%s3 + $0x8] sm:$0xff]
  %v429 = vld [vmem:[%s3 + $0x10] sm:$0xff]
  %v430 = vld [vmem:[%s3 + $0x18] sm:$0xff]
  %v431 = vld [vmem:[%s3 + $0x20] sm:$0xff]
  %v432 = vld [vmem:[%s3 + $0x28] sm:$0xff]
  %v433 = vld [vmem:[%s3 + $0x30] sm:$0xff]
  %v434 = vld [vmem:[%s3 + $0x38] sm:$0xff]
  %v435 = vld [vmem:[%s3 + $0x40] sm:$0xff]
  %v436 = vld [vmem:[%s3 + $0x48] sm:$0xff]
  %v437 = vld [vmem:[%s3 + $0x50] sm:$0xff]
  %v438 = vld [vmem:[%s3 + $0x58] sm:$0xff]
  %v439 = vld [vmem:[%s3 + $0x60] sm:$0xff]
  %v440 = vld [vmem:[%s3 + $0x68] sm:$0xff]
  %v441 = vld [vmem:[%s3 + $0x70] sm:$0xff]
  %v442 = vld [vmem:[%s3 + $0x78] sm:$0xff]
  %443 = vmatprep.subr.mxu0 0.0
  %444 = vmatpush1.msra.mxu0 %v427
  %445 = vmatprep.subr.mxu0 0.0
  %446 = vmatpush1.msra.mxu0 %v428
  %447 = vmatprep.subr.mxu0 0.0
  %448 = vmatpush1.msra.mxu0 %v429
  %449 = vmatprep.subr.mxu0 0.0
  %450 = vmatpush1.msra.mxu0 %v430
  %451 = vmatprep.subr.mxu0 0.0
  %452 = vmatpush1.msra.mxu0 %v431
  %453 = vmatprep.subr.mxu0 0.0
  %454 = vmatpush1.msra.mxu0 %v432
  %455 = vmatprep.subr.mxu0 0.0
  %456 = vmatpush1.msra.mxu0 %v433
  %457 = vmatprep.subr.mxu0 0.0
  %458 = vmatpush1.msra.mxu0 %v434
  %459 = vmatprep.subr.mxu0 0.0
  %460 = vmatpush1.msra.mxu0 %v435
  %461 = vmatprep.subr.mxu0 0.0
  %462 = vmatpush1.msra.mxu0 %v436
  %463 = vmatprep.subr.mxu0 0.0
  %464 = vmatpush1.msra.mxu0 %v437
  %465 = vmatprep.subr.mxu0 0.0
  %466 = vmatpush1.msra.mxu0 %v438
  %467 = vmatprep.subr.mxu0 0.0
  %468 = vmatpush1.msra.mxu0 %v439
  %469 = vmatprep.subr.mxu0 0.0
  %470 = vmatpush1.msra.mxu0 %v440
  %471 = vmatprep.subr.mxu0 0.0
  %472 = vmatpush1.msra.mxu0 %v441
  %473 = vmatprep.subr.mxu0 0.0
  %474 = vmatpush1.msra.mxu0 %v442
  %475 = vmatprep.subr.mxu0 0.0
  %476 = vmatpush1.msra.mxu0 0.0
  %477 = vmatprep.subr.mxu0 0.0
  %478 = vmatpush1.msra.mxu0 0.0
  %479 = vmatprep.subr.mxu0 0.0
  %480 = vmatpush1.msra.mxu0 0.0
  %481 = vmatprep.subr.mxu0 0.0
  %482 = vmatpush1.msra.mxu0 0.0
  %483 = vmatprep.subr.mxu0 0.0
  %484 = vmatpush1.msra.mxu0 0.0
  %485 = vmatprep.subr.mxu0 0.0
  %486 = vmatpush1.msra.mxu0 0.0
  %487 = vmatprep.subr.mxu0 0.0
  %488 = vmatpush1.msra.mxu0 0.0
  %489 = vmatprep.subr.mxu0 0.0
  %490 = vmatpush1.msra.mxu0 0.0
  %491 = vmatprep.subr.mxu0 0.0
  %492 = vmatpush1.msra.mxu0 0.0
  %493 = vmatprep.subr.mxu0 0.0
  %494 = vmatpush1.msra.mxu0 0.0
  %495 = vmatprep.subr.mxu0 0.0
  %496 = vmatpush1.msra.mxu0 0.0
  %497 = vmatprep.subr.mxu0 0.0
  %498 = vmatpush1.msra.mxu0 0.0
  %499 = vmatprep.subr.mxu0 0.0
  %500 = vmatpush1.msra.mxu0 0.0
  %501 = vmatprep.subr.mxu0 0.0
  %502 = vmatpush1.msra.mxu0 0.0
  %503 = vmatprep.subr.mxu0 0.0
  %504 = vmatpush1.msra.mxu0 0.0
  %505 = vmatprep.subr.mxu0 0.0
  %506 = vmatpush1.msra.mxu0 0.0
  %507 = vmatprep.mubr.f32.mxu0 0.0
  %508 = vmatmul.mubr.f32.gmra.mrb[0].mxu0 %v413
  %v509 = vpop.f32.mrb[0].mxu0
  %v510 = vadd.f32 0.0, %v509
  %v511 = vpop.f32.mrb[0].mxu0
  %512 = vdwg.mxu0
  %513 = vmatprep.subr.mxu0 0.0
  %514 = vmatpush1.msra.mxu0 %v427
  %515 = vmatprep.subr.mxu0 0.0
  %516 = vmatpush1.msra.mxu0 %v428
  %517 = vmatprep.subr.mxu0 0.0
  %518 = vmatpush1.msra.mxu0 %v429
  %519 = vmatprep.subr.mxu0 0.0
  %520 = vmatpush1.msra.mxu0 %v430
  %521 = vmatprep.subr.mxu0 0.0
  %522 = vmatpush1.msra.mxu0 %v431
  %523 = vmatprep.subr.mxu0 0.0
  %524 = vmatpush1.msra.mxu0 %v432
  %525 = vmatprep.subr.mxu0 0.0
  %526 = vmatpush1.msra.mxu0 %v433
  %527 = vmatprep.subr.mxu0 0.0
  %528 = vmatpush1.msra.mxu0 %v434
  %529 = vmatprep.subr.mxu0 0.0
  %530 = vmatpush1.msra.mxu0 %v435
  %531 = vmatprep.subr.mxu0 0.0
  %532 = vmatpush1.msra.mxu0 %v436
  %533 = vmatprep.subr.mxu0 0.0
  %534 = vmatpush1.msra.mxu0 %v437
  %535 = vmatprep.subr.mxu0 0.0
  %536 = vmatpush1.msra.mxu0 %v438
  %537 = vmatprep.subr.mxu0 0.0
  %538 = vmatpush1.msra.mxu0 %v439
  %539 = vmatprep.subr.mxu0 0.0
  %540 = vmatpush1.msra.mxu0 %v440
  %541 = vmatprep.subr.mxu0 0.0
  %542 = vmatpush1.msra.mxu0 %v441
  %543 = vmatprep.subr.mxu0 0.0
  %544 = vmatpush1.msra.mxu0 %v442
  %545 = vmatprep.subr.mxu0 0.0
  %546 = vmatpush1.msra.mxu0 0.0
  %547 = vmatprep.subr.mxu0 0.0
  %548 = vmatpush1.msra.mxu0 0.0
  %549 = vmatprep.subr.mxu0 0.0
  %550 = vmatpush1.msra.mxu0 0.0
  %551 = vmatprep.subr.mxu0 0.0
  %552 = vmatpush1.msra.mxu0 0.0
  %553 = vmatprep.subr.mxu0 0.0
  %554 = vmatpush1.msra.mxu0 0.0
  %555 = vmatprep.subr.mxu0 0.0
  %556 = vmatpush1.msra.mxu0 0.0
  %557 = vmatprep.subr.mxu0 0.0
  %558 = vmatpush1.msra.mxu0 0.0
  %559 = vmatprep.subr.mxu0 0.0
  %560 = vmatpush1.msra.mxu0 0.0
  %561 = vmatprep.subr.mxu0 0.0
  %562 = vmatpush1.msra.mxu0 0.0
  %563 = vmatprep.subr.mxu0 0.0
  %564 = vmatpush1.msra.mxu0 0.0
  %565 = vmatprep.subr.mxu0 0.0
  %566 = vmatpush1.msra.mxu0 0.0
  %567 = vmatprep.subr.mxu0 0.0
  %568 = vmatpush1.msra.mxu0 0.0
  %569 = vmatprep.subr.mxu0 0.0
  %570 = vmatpush1.msra.mxu0 0.0
  %571 = vmatprep.subr.mxu0 0.0
  %572 = vmatpush1.msra.mxu0 0.0
  %573 = vmatprep.subr.mxu0 0.0
  %574 = vmatpush1.msra.mxu0 0.0
  %575 = vmatprep.subr.mxu0 0.0
  %576 = vmatpush1.msra.mxu0 0.0
  %577 = vmatprep.mubr.f32.mxu0 0.0
  %578 = vmatmul.mubr.f32.gmra.mrb[0].mxu0 %v426
  %v579 = vpop.f32.mrb[0].mxu0
  %v580 = vadd.f32 0.0, %v579
  %v581 = vpop.f32.mrb[0].mxu0
  %582 = vdwg.mxu0
  %v583 = vmul.f32 %v510, %v510
  %v584 = vsub.f32 %v580, %v583
  %v585 = vld [vmem:[%s4] sm:$0x1]
  %v586 = vadd.f32 %v584, 1e-05
  %v587 = vrsqrt.pop %v586
  %v588 = vmul.f32 %v585, %v587
  %v589 = vld [vmem:[%s5] sm:$0x1]
  %v590 = vmul.f32 %v510, %v588
  %v591 = vsub.f32 %v589, %v590
  %v593 = vlaneseq
  %v594 = vshrl.u32 %v593, 7
  %v595 = vsub.s32 0, %v594
  %v596 = vrot.slane %v588, %v595
  %v598 = vmul.f32 %v401, %v596
  %v599 = vmul.f32 %v402, %v596
  %v600 = vmul.f32 %v403, %v596
  %v601 = vmul.f32 %v404, %v596
  %v603 = vlaneseq
  %v604 = vshrl.u32 %v603, 7
  %v605 = vsub.s32 0, %v604
  %v606 = vrot.slane %v591, %v605
  %v608 = vadd.f32 %v598, %v606
  %v609 = vadd.f32 %v599, %v606
  %v610 = vadd.f32 %v600, %v606
  %v611 = vadd.f32 %v601, %v606
  %v612 = vmax.f32 %v608, 0.0
  %v613 = vmax.f32 %v609, 0.0
  %v614 = vmax.f32 %v610, 0.0
  %v615 = vmax.f32 %v611, 0.0
  %616 = vst [vmem:[#allocation2 + $0x1] sm:$0xff] %v612
  %617 = vst [vmem:[#allocation2 + $0x9] sm:$0xff] %v613
  %618 = vst [vmem:[#allocation2 + $0x19] sm:$0xff] %v614
  %619 = vst [vmem:[#allocation2 + $0x21] sm:$0xff] %v615
  %v620 = vld [vmem:[#allocation2] sm:$0xff]
  %v621 = vld [vmem:[#allocation2 + $0x8] sm:$0xff]
  %v622 = vld [vmem:[#allocation2 + $0x18] sm:$0xff]
  %v623 = vld [vmem:[#allocation2 + $0x20] sm:$0xff]
  %v624 = vpack.c.bf16 %v621, %v620
  %v625 = vpack.c.bf16 %v623, %v622
  %v626 = vld [vmem:[%s2] sm:$0xf]
  %v627 = vld [vmem:[%s2 + $0x4] sm:$0xf]
  %v628 = vld [vmem:[%s2 + $0x8] sm:$0xf]
  %v629 = vld [vmem:[%s2 + $0xc] sm:$0xf]
  %v630 = vld [vmem:[%s2 + $0x10] sm:$0xf]
  %v631 = vld [vmem:[%s2 + $0x14] sm:$0xf]
  %v632 = vld [vmem:[%s2 + $0x18] sm:$0xf]
  %v633 = vld [vmem:[%s2 + $0x1c] sm:$0xf]
  %v634 = vld [vmem:[%s2 + $0x20] sm:$0xf]
  %v635 = vld [vmem:[%s2 + $0x24] sm:$0xf]
  %v636 = vld [vmem:[%s2 + $0x28] sm:$0xf]
  %v637 = vld [vmem:[%s2 + $0x2c] sm:$0xf]
  %v638 = vld [vmem:[%s2 + $0x30] sm:$0xf]
  %v639 = vld [vmem:[%s2 + $0x34] sm:$0xf]
  %v640 = vld [vmem:[%s2 + $0x38] sm:$0xf]
  %v641 = vld [vmem:[%s2 + $0x3c] sm:$0xf]
  %v642 = vld [vmem:[#allocation2 + $0x1] sm:$0xff]
  %v643 = vld [vmem:[#allocation2 + $0x9] sm:$0xff]
  %v644 = vld [vmem:[#allocation2 + $0x19] sm:$0xff]
  %v645 = vld [vmem:[#allocation2 + $0x21] sm:$0xff]
  %v646 = vpack.c.bf16 %v643, %v642
  %v647 = vpack.c.bf16 %v645, %v644
  %s648 = scalar_lea.vmem %s2, 64
  %v649 = vld [vmem:[%s648] sm:$0xf]
  %v650 = vld [vmem:[%s648 + $0x4] sm:$0xf]
  %v651 = vld [vmem:[%s648 + $0x8] sm:$0xf]
  %v652 = vld [vmem:[%s648 + $0xc] sm:$0xf]
  %v653 = vld [vmem:[%s648 + $0x10] sm:$0xf]
  %v654 = vld [vmem:[%s648 + $0x14] sm:$0xf]
  %v655 = vld [vmem:[%s648 + $0x18] sm:$0xf]
  %v656 = vld [vmem:[%s648 + $0x1c] sm:$0xf]
  %v657 = vld [vmem:[%s648 + $0x20] sm:$0xf]
  %v658 = vld [vmem:[%s648 + $0x24] sm:$0xf]
  %v659 = vld [vmem:[%s648 + $0x28] sm:$0xf]
  %v660 = vld [vmem:[%s648 + $0x2c] sm:$0xf]
  %v661 = vld [vmem:[%s648 + $0x30] sm:$0xf]
  %v662 = vld [vmem:[%s648 + $0x34] sm:$0xf]
  %v663 = vld [vmem:[%s648 + $0x38] sm:$0xf]
  %v664 = vld [vmem:[%s648 + $0x3c] sm:$0xf]
  %v681 = vunpack.c.l.b16 %v649
  %v682 = vunpack.c.l.b16 %v650
  %v683 = vunpack.c.l.b16 %v651
  %v684 = vunpack.c.l.b16 %v652
  %v685 = vunpack.c.l.b16 %v653
  %v686 = vunpack.c.l.b16 %v654
  %v687 = vunpack.c.l.b16 %v655
  %v688 = vunpack.c.l.b16 %v656
  %v689 = vunpack.c.l.b16 %v657
  %v690 = vunpack.c.l.b16 %v658
  %v691 = vunpack.c.l.b16 %v659
  %v692 = vunpack.c.l.b16 %v660
  %v693 = vunpack.c.l.b16 %v661
  %v694 = vunpack.c.l.b16 %v662
  %v695 = vunpack.c.l.b16 %v663
  %v696 = vunpack.c.l.b16 %v664
  %v697 = vpack.c.b16 %v682, %v681
  %v698 = vpack.c.b16 %v684, %v683
  %v699 = vpack.c.b16 %v686, %v685
  %v700 = vpack.c.b16 %v688, %v687
  %v701 = vpack.c.b16 %v690, %v689
  %v702 = vpack.c.b16 %v692, %v691
  %v703 = vpack.c.b16 %v694, %v693
  %v704 = vpack.c.b16 %v696, %v695
  %713 = vmatprep.subr.bf16.mxu0 0
  %714 = vmatpush1.bf16.msra.mxu0 %v697
  %715 = vmatprep.subr.bf16.mxu0 0
  %716 = vmatpush1.bf16.msra.mxu0 %v698
  %717 = vmatprep.subr.bf16.mxu0 0
  %718 = vmatpush1.bf16.msra.mxu0 %v699
  %719 = vmatprep.subr.bf16.mxu0 0
  %720 = vmatpush1.bf16.msra.mxu0 %v700
  %721 = vmatprep.subr.bf16.mxu0 0
  %722 = vmatpush1.bf16.msra.mxu0 %v701
  %723 = vmatprep.subr.bf16.mxu0 0
  %724 = vmatpush1.bf16.msra.mxu0 %v702
  %725 = vmatprep.subr.bf16.mxu0 0
  %726 = vmatpush1.bf16.msra.mxu0 %v703
  %727 = vmatprep.subr.bf16.mxu0 0
  %728 = vmatpush1.bf16.msra.mxu0 %v704
  %729 = vmatprep.subr.bf16.mxu0 0
  %730 = vmatpush1.bf16.msra.mxu0 0
  %731 = vmatprep.subr.bf16.mxu0 0
  %732 = vmatpush1.bf16.msra.mxu0 0
  %733 = vmatprep.subr.bf16.mxu0 0
  %734 = vmatpush1.bf16.msra.mxu0 0
  %735 = vmatprep.subr.bf16.mxu0 0
  %736 = vmatpush1.bf16.msra.mxu0 0
  %737 = vmatprep.subr.bf16.mxu0 0
  %738 = vmatpush1.bf16.msra.mxu0 0
  %739 = vmatprep.subr.bf16.mxu0 0
  %740 = vmatpush1.bf16.msra.mxu0 0
  %741 = vmatprep.subr.bf16.mxu0 0
  %742 = vmatpush1.bf16.msra.mxu0 0
  %743 = vmatprep.subr.bf16.mxu0 0
  %744 = vmatpush1.bf16.msra.mxu0 0
  %745 = vmatprep.mubr.bf16.mxu0 0
  %746 = vmatmul.mubr.bf16.gmra.mrb[0].mxu0 %v646
  %v747 = vpop.f32.mrb[0].mxu0
  %v748 = vadd.f32 0.0, %v747
  %v749 = vpop.f32.mrb[0].mxu0
  %v750 = vpop.f32.mrb[0].mxu0
  %v751 = vadd.f32 0.0, %v750
  %v752 = vpop.f32.mrb[0].mxu0
  %753 = vmatprep.mubr.bf16.mxu0 0
  %754 = vmatmul.mubr.bf16.gmra.mrb[0].mxu0 %v647
  %v755 = vpop.f32.mrb[0].mxu0
  %v756 = vadd.f32 0.0, %v755
  %v757 = vpop.f32.mrb[0].mxu0
  %v758 = vpop.f32.mrb[0].mxu0
  %v759 = vadd.f32 0.0, %v758
  %v760 = vpop.f32.mrb[0].mxu0
  %761 = vdwg.mxu0
  %v778 = vunpack.c.l.b16 %v626
  %v779 = vunpack.c.l.b16 %v627
  %v780 = vunpack.c.l.b16 %v628
  %v781 = vunpack.c.l.b16 %v629
  %v782 = vunpack.c.l.b16 %v630
  %v783 = vunpack.c.l.b16 %v631
  %v784 = vunpack.c.l.b16 %v632
  %v785 = vunpack.c.l.b16 %v633
  %v786 = vunpack.c.l.b16 %v634
  %v787 = vunpack.c.l.b16 %v635
  %v788 = vunpack.c.l.b16 %v636
  %v789 = vunpack.c.l.b16 %v637
  %v790 = vunpack.c.l.b16 %v638
  %v791 = vunpack.c.l.b16 %v639
  %v792 = vunpack.c.l.b16 %v640
  %v793 = vunpack.c.l.b16 %v641
  %v794 = vpack.c.b16 %v779, %v778
  %v795 = vpack.c.b16 %v781, %v780
  %v796 = vpack.c.b16 %v783, %v782
  %v797 = vpack.c.b16 %v785, %v784
  %v798 = vpack.c.b16 %v787, %v786
  %v799 = vpack.c.b16 %v789, %v788
  %v800 = vpack.c.b16 %v791, %v790
  %v801 = vpack.c.b16 %v793, %v792
  %810 = vmatprep.subr.bf16.mxu0 0
  %811 = vmatpush1.bf16.msra.mxu0 %v794
  %812 = vmatprep.subr.bf16.mxu0 0
  %813 = vmatpush1.bf16.msra.mxu0 %v795
  %814 = vmatprep.subr.bf16.mxu0 0
  %815 = vmatpush1.bf16.msra.mxu0 %v796
  %816 = vmatprep.subr.bf16.mxu0 0
  %817 = vmatpush1.bf16.msra.mxu0 %v797
  %818 = vmatprep.subr.bf16.mxu0 0
  %819 = vmatpush1.bf16.msra.mxu0 %v798
  %820 = vmatprep.subr.bf16.mxu0 0
  %821 = vmatpush1.bf16.msra.mxu0 %v799
  %822 = vmatprep.subr.bf16.mxu0 0
  %823 = vmatpush1.bf16.msra.mxu0 %v800
  %824 = vmatprep.subr.bf16.mxu0 0
  %825 = vmatpush1.bf16.msra.mxu0 %v801
  %826 = vmatprep.subr.bf16.mxu0 0
  %827 = vmatpush1.bf16.msra.mxu0 0
  %828 = vmatprep.subr.bf16.mxu0 0
  %829 = vmatpush1.bf16.msra.mxu0 0
  %830 = vmatprep.subr.bf16.mxu0 0
  %831 = vmatpush1.bf16.msra.mxu0 0
  %832 = vmatprep.subr.bf16.mxu0 0
  %833 = vmatpush1.bf16.msra.mxu0 0
  %834 = vmatprep.subr.bf16.mxu0 0
  %835 = vmatpush1.bf16.msra.mxu0 0
  %836 = vmatprep.subr.bf16.mxu0 0
  %837 = vmatpush1.bf16.msra.mxu0 0
  %838 = vmatprep.subr.bf16.mxu0 0
  %839 = vmatpush1.bf16.msra.mxu0 0
  %840 = vmatprep.subr.bf16.mxu0 0
  %841 = vmatpush1.bf16.msra.mxu0 0
  %842 = vmatprep.mubr.bf16.mxu0 0
  %843 = vmatmul.mubr.bf16.gmra.mrb[0].mxu0 %v624
  %v844 = vpop.f32.mrb[0].mxu0
  %v845 = vadd.f32 %v748, %v844
  %v846 = vpop.f32.mrb[0].mxu0
  %v847 = vpop.f32.mrb[0].mxu0
  %v848 = vadd.f32 %v751, %v847
  %v849 = vpop.f32.mrb[0].mxu0
  %850 = vmatprep.mubr.bf16.mxu0 0
  %851 = vmatmul.mubr.bf16.gmra.mrb[0].mxu0 %v625
  %v852 = vpop.f32.mrb[0].mxu0
  %v853 = vadd.f32 %v756, %v852
  %v854 = vpop.f32.mrb[0].mxu0
  %v855 = vpop.f32.mrb[0].mxu0
  %v856 = vadd.f32 %v759, %v855
  %v857 = vpop.f32.mrb[0].mxu0
  %858 = vdwg.mxu0
  %v859 = vld [vmem:[#allocation2 + $0x2] sm:$0xff]
  %v860 = vld [vmem:[#allocation2 + $0xa] sm:$0xff]
  %v861 = vld [vmem:[#allocation2 + $0x1a] sm:$0xff]
  %v862 = vld [vmem:[#allocation2 + $0x22] sm:$0xff]
  %v863 = vpack.c.bf16 %v860, %v859
  %v864 = vpack.c.bf16 %v862, %v861
  %s865 = scalar_lea.vmem %s2, 128
  %v866 = vld [vmem:[%s865] sm:$0xf]
  %v867 = vld [vmem:[%s865 + $0x4] sm:$0xf]
  %v868 = vld [vmem:[%s865 + $0x8] sm:$0xf]
  %v869 = vld [vmem:[%s865 + $0xc] sm:$0xf]
  %v870 = vld [vmem:[%s865 + $0x10] sm:$0xf]
  %v871 = vld [vmem:[%s865 + $0x14] sm:$0xf]
  %v872 = vld [vmem:[%s865 + $0x18] sm:$0xf]
  %v873 = vld [vmem:[%s865 + $0x1c] sm:$0xf]
  %v874 = vld [vmem:[%s865 + $0x20] sm:$0xf]
  %v875 = vld [vmem:[%s865 + $0x24] sm:$0xf]
  %v876 = vld [vmem:[%s865 + $0x28] sm:$0xf]
  %v877 = vld [vmem:[%s865 + $0x2c] sm:$0xf]
  %v878 = vld [vmem:[%s865 + $0x30] sm:$0xf]
  %v879 = vld [vmem:[%s865 + $0x34] sm:$0xf]
  %v880 = vld [vmem:[%s865 + $0x38] sm:$0xf]
  %v881 = vld [vmem:[%s865 + $0x3c] sm:$0xf]
  %v898 = vunpack.c.l.b16 %v866
  %v899 = vunpack.c.l.b16 %v867
  %v900 = vunpack.c.l.b16 %v868
  %v901 = vunpack.c.l.b16 %v869
  %v902 = vunpack.c.l.b16 %v870
  %v903 = vunpack.c.l.b16 %v871
  %v904 = vunpack.c.l.b16 %v872
  %v905 = vunpack.c.l.b16 %v873
  %v906 = vunpack.c.l.b16 %v874
  %v907 = vunpack.c.l.b16 %v875
  %v908 = vunpack.c.l.b16 %v876
  %v909 = vunpack.c.l.b16 %v877
  %v910 = vunpack.c.l.b16 %v878
  %v911 = vunpack.c.l.b16 %v879
  %v912 = vunpack.c.l.b16 %v880
  %v913 = vunpack.c.l.b16 %v881
  %v914 = vpack.c.b16 %v899, %v898
  %v915 = vpack.c.b16 %v901, %v900
  %v916 = vpack.c.b16 %v903, %v902
  %v917 = vpack.c.b16 %v905, %v904
  %v918 = vpack.c.b16 %v907, %v906
  %v919 = vpack.c.b16 %v909, %v908
  %v920 = vpack.c.b16 %v911, %v910
  %v921 = vpack.c.b16 %v913, %v912
  %930 = vmatprep.subr.bf16.mxu0 0
  %931 = vmatpush1.bf16.msra.mxu0 %v914
  %932 = vmatprep.subr.bf16.mxu0 0
  %933 = vmatpush1.bf16.msra.mxu0 %v915
  %934 = vmatprep.subr.bf16.mxu0 0
  %935 = vmatpush1.bf16.msra.mxu0 %v916
  %936 = vmatprep.subr.bf16.mxu0 0
  %937 = vmatpush1.bf16.msra.mxu0 %v917
  %938 = vmatprep.subr.bf16.mxu0 0
  %939 = vmatpush1.bf16.msra.mxu0 %v918
  %940 = vmatprep.subr.bf16.mxu0 0
  %941 = vmatpush1.bf16.msra.mxu0 %v919
  %942 = vmatprep.subr.bf16.mxu0 0
  %943 = vmatpush1.bf16.msra.mxu0 %v920
  %944 = vmatprep.subr.bf16.mxu0 0
  %945 = vmatpush1.bf16.msra.mxu0 %v921
  %946 = vmatprep.subr.bf16.mxu0 0
  %947 = vmatpush1.bf16.msra.mxu0 0
  %948 = vmatprep.subr.bf16.mxu0 0
  %949 = vmatpush1.bf16.msra.mxu0 0
  %950 = vmatprep.subr.bf16.mxu0 0
  %951 = vmatpush1.bf16.msra.mxu0 0
  %952 = vmatprep.subr.bf16.mxu0 0
  %953 = vmatpush1.bf16.msra.mxu0 0
  %954 = vmatprep.subr.bf16.mxu0 0
  %955 = vmatpush1.bf16.msra.mxu0 0
  %956 = vmatprep.subr.bf16.mxu0 0
  %957 = vmatpush1.bf16.msra.mxu0 0
  %958 = vmatprep.subr.bf16.mxu0 0
  %959 = vmatpush1.bf16.msra.mxu0 0
  %960 = vmatprep.subr.bf16.mxu0 0
  %961 = vmatpush1.bf16.msra.mxu0 0
  %962 = vmatprep.mubr.bf16.mxu0 0
  %963 = vmatmul.mubr.bf16.gmra.mrb[0].mxu0 %v863
  %v964 = vpop.f32.mrb[0].mxu0
  %v965 = vadd.f32 0.0, %v964
  %v966 = vpop.f32.mrb[0].mxu0
  %v967 = vpop.f32.mrb[0].mxu0
  %v968 = vadd.f32 0.0, %v967
  %v969 = vpop.f32.mrb[0].mxu0
  %970 = vmatprep.mubr.bf16.mxu0 0
  %971 = vmatmul.mubr.bf16.gmra.mrb[0].mxu0 %v864
  %v972 = vpop.f32.mrb[0].mxu0
  %v973 = vadd.f32 0.0, %v972
  %v974 = vpop.f32.mrb[0].mxu0
  %v975 = vpop.f32.mrb[0].mxu0
  %v976 = vadd.f32 0.0, %v975
  %v977 = vpop.f32.mrb[0].mxu0
  %978 = vdwg.mxu0
  %v979 = vadd.f32 %v845, %v965
  %v980 = vadd.f32 %v848, %v968
  %v981 = vadd.f32 %v853, %v973
  %v982 = vadd.f32 %v856, %v976
  %v983 = vadd.f32 %v979, %v980
  %v984 = vadd.f32 %v983, %v981
  %v985 = vadd.f32 %v984, %v982
  %v986 = vrot.slane %v985, 4
  %v987 = vadd.f32 %v985, %v986
  %v988 = vrot.slane %v987, 2
  %v989 = vadd.f32 %v987, %v988
  %v990 = vrot.slane %v989, 1
  %v991 = vadd.f32 %v989, %v990
  %v992 = vmul.f32 %v979, %v979
  %v993 = vmul.f32 %v980, %v980
  %v994 = vmul.f32 %v981, %v981
  %v995 = vmul.f32 %v982, %v982
  %v996 = vadd.f32 %v992, %v993
  %v997 = vadd.f32 %v996, %v994
  %v998 = vadd.f32 %v997, %v995
  %v999 = vrot.slane %v998, 4
  %v1000 = vadd.f32 %v998, %v999
  %v1001 = vrot.slane %v1000, 2
  %v1002 = vadd.f32 %v1000, %v1001
  %v1003 = vrot.slane %v1002, 1
  %v1004 = vadd.f32 %v1002, %v1003
  %v1005 = vld [vmem:[%s3] sm:$0xff]
  %v1006 = vld [vmem:[%s3 + $0x8] sm:$0xff]
  %v1007 = vld [vmem:[%s3 + $0x10] sm:$0xff]
  %v1008 = vld [vmem:[%s3 + $0x18] sm:$0xff]
  %v1009 = vld [vmem:[%s3 + $0x20] sm:$0xff]
  %v1010 = vld [vmem:[%s3 + $0x28] sm:$0xff]
  %v1011 = vld [vmem:[%s3 + $0x30] sm:$0xff]
  %v1012 = vld [vmem:[%s3 + $0x38] sm:$0xff]
  %v1013 = vld [vmem:[%s3 + $0x40] sm:$0xff]
  %v1014 = vld [vmem:[%s3 + $0x48] sm:$0xff]
  %v1015 = vld [vmem:[%s3 + $0x50] sm:$0xff]
  %v1016 = vld [vmem:[%s3 + $0x58] sm:$0xff]
  %v1017 = vld [vmem:[%s3 + $0x60] sm:$0xff]
  %v1018 = vld [vmem:[%s3 + $0x68] sm:$0xff]
  %v1019 = vld [vmem:[%s3 + $0x70] sm:$0xff]
  %v1020 = vld [vmem:[%s3 + $0x78] sm:$0xff]
  %1021 = vmatprep.subr.mxu0 0.0
  %1022 = vmatpush1.msra.mxu0 %v1005
  %1023 = vmatprep.subr.mxu0 0.0
  %1024 = vmatpush1.msra.mxu0 %v1006
  %1025 = vmatprep.subr.mxu0 0.0
  %1026 = vmatpush1.msra.mxu0 %v1007
  %1027 = vmatprep.subr.mxu0 0.0
  %1028 = vmatpush1.msra.mxu0 %v1008
  %1029 = vmatprep.subr.mxu0 0.0
  %1030 = vmatpush1.msra.mxu0 %v1009
  %1031 = vmatprep.subr.mxu0 0.0
  %1032 = vmatpush1.msra.mxu0 %v1010
  %1033 = vmatprep.subr.mxu0 0.0
  %1034 = vmatpush1.msra.mxu0 %v1011
  %1035 = vmatprep.subr.mxu0 0.0
  %1036 = vmatpush1.msra.mxu0 %v1012
  %1037 = vmatprep.subr.mxu0 0.0
  %1038 = vmatpush1.msra.mxu0 %v1013
  %1039 = vmatprep.subr.mxu0 0.0
  %1040 = vmatpush1.msra.mxu0 %v1014
  %1041 = vmatprep.subr.mxu0 0.0
  %1042 = vmatpush1.msra.mxu0 %v1015
  %1043 = vmatprep.subr.mxu0 0.0
  %1044 = vmatpush1.msra.mxu0 %v1016
  %1045 = vmatprep.subr.mxu0 0.0
  %1046 = vmatpush1.msra.mxu0 %v1017
  %1047 = vmatprep.subr.mxu0 0.0
  %1048 = vmatpush1.msra.mxu0 %v1018
  %1049 = vmatprep.subr.mxu0 0.0
  %1050 = vmatpush1.msra.mxu0 %v1019
  %1051 = vmatprep.subr.mxu0 0.0
  %1052 = vmatpush1.msra.mxu0 %v1020
  %1053 = vmatprep.subr.mxu0 0.0
  %1054 = vmatpush1.msra.mxu0 0.0
  %1055 = vmatprep.subr.mxu0 0.0
  %1056 = vmatpush1.msra.mxu0 0.0
  %1057 = vmatprep.subr.mxu0 0.0
  %1058 = vmatpush1.msra.mxu0 0.0
  %1059 = vmatprep.subr.mxu0 0.0
  %1060 = vmatpush1.msra.mxu0 0.0
  %1061 = vmatprep.subr.mxu0 0.0
  %1062 = vmatpush1.msra.mxu0 0.0
  %1063 = vmatprep.subr.mxu0 0.0
  %1064 = vmatpush1.msra.mxu0 0.0
  %1065 = vmatprep.subr.mxu0 0.0
  %1066 = vmatpush1.msra.mxu0 0.0
  %1067 = vmatprep.subr.mxu0 0.0
  %1068 = vmatpush1.msra.mxu0 0.0
  %1069 = vmatprep.subr.mxu0 0.0
  %1070 = vmatpush1.msra.mxu0 0.0
  %1071 = vmatprep.subr.mxu0 0.0
  %1072 = vmatpush1.msra.mxu0 0.0
  %1073 = vmatprep.subr.mxu0 0.0
  %1074 = vmatpush1.msra.mxu0 0.0
  %1075 = vmatprep.subr.mxu0 0.0
  %1076 = vmatpush1.msra.mxu0 0.0
  %1077 = vmatprep.subr.mxu0 0.0
  %1078 = vmatpush1.msra.mxu0 0.0
  %1079 = vmatprep.subr.mxu0 0.0
  %1080 = vmatpush1.msra.mxu0 0.0
  %1081 = vmatprep.subr.mxu0 0.0
  %1082 = vmatpush1.msra.mxu0 0.0
  %1083 = vmatprep.subr.mxu0 0.0
  %1084 = vmatpush1.msra.mxu0 0.0
  %1085 = vmatprep.mubr.f32.mxu0 0.0
  %1086 = vmatmul.mubr.f32.gmra.mrb[0].mxu0 %v991
  %v1087 = vpop.f32.mrb[0].mxu0
  %v1088 = vadd.f32 0.0, %v1087
  %v1089 = vpop.f32.mrb[0].mxu0
  %1090 = vdwg.mxu0
  %1091 = vmatprep.subr.mxu0 0.0
  %1092 = vmatpush1.msra.mxu0 %v1005
  %1093 = vmatprep.subr.mxu0 0.0
  %1094 = vmatpush1.msra.mxu0 %v1006
  %1095 = vmatprep.subr.mxu0 0.0
  %1096 = vmatpush1.msra.mxu0 %v1007
  %1097 = vmatprep.subr.mxu0 0.0
  %1098 = vmatpush1.msra.mxu0 %v1008
  %1099 = vmatprep.subr.mxu0 0.0
  %1100 = vmatpush1.msra.mxu0 %v1009
  %1101 = vmatprep.subr.mxu0 0.0
  %1102 = vmatpush1.msra.mxu0 %v1010
  %1103 = vmatprep.subr.mxu0 0.0
  %1104 = vmatpush1.msra.mxu0 %v1011
  %1105 = vmatprep.subr.mxu0 0.0
  %1106 = vmatpush1.msra.mxu0 %v1012
  %1107 = vmatprep.subr.mxu0 0.0
  %1108 = vmatpush1.msra.mxu0 %v1013
  %1109 = vmatprep.subr.mxu0 0.0
  %1110 = vmatpush1.msra.mxu0 %v1014
  %1111 = vmatprep.subr.mxu0 0.0
  %1112 = vmatpush1.msra.mxu0 %v1015
  %1113 = vmatprep.subr.mxu0 0.0
  %1114 = vmatpush1.msra.mxu0 %v1016
  %1115 = vmatprep.subr.mxu0 0.0
  %1116 = vmatpush1.msra.mxu0 %v1017
  %1117 = vmatprep.subr.mxu0 0.0
  %1118 = vmatpush1.msra.mxu0 %v1018
  %1119 = vmatprep.subr.mxu0 0.0
  %1120 = vmatpush1.msra.mxu0 %v1019
  %1121 = vmatprep.subr.mxu0 0.0
  %1122 = vmatpush1.msra.mxu0 %v1020
  %1123 = vmatprep.subr.mxu0 0.0
  %1124 = vmatpush1.msra.mxu0 0.0
  %1125 = vmatprep.subr.mxu0 0.0
  %1126 = vmatpush1.msra.mxu0 0.0
  %1127 = vmatprep.subr.mxu0 0.0
  %1128 = vmatpush1.msra.mxu0 0.0
  %1129 = vmatprep.subr.mxu0 0.0
  %1130 = vmatpush1.msra.mxu0 0.0
  %1131 = vmatprep.subr.mxu0 0.0
  %1132 = vmatpush1.msra.mxu0 0.0
  %1133 = vmatprep.subr.mxu0 0.0
  %1134 = vmatpush1.msra.mxu0 0.0
  %1135 = vmatprep.subr.mxu0 0.0
  %1136 = vmatpush1.msra.mxu0 0.0
  %1137 = vmatprep.subr.mxu0 0.0
  %1138 = vmatpush1.msra.mxu0 0.0
  %1139 = vmatprep.subr.mxu0 0.0
  %1140 = vmatpush1.msra.mxu0 0.0
  %1141 = vmatprep.subr.mxu0 0.0
  %1142 = vmatpush1.msra.mxu0 0.0
  %1143 = vmatprep.subr.mxu0 0.0
  %1144 = vmatpush1.msra.mxu0 0.0
  %1145 = vmatprep.subr.mxu0 0.0
  %1146 = vmatpush1.msra.mxu0 0.0
  %1147 = vmatprep.subr.mxu0 0.0
  %1148 = vmatpush1.msra.mxu0 0.0
  %1149 = vmatprep.subr.mxu0 0.0
  %1150 = vmatpush1.msra.mxu0 0.0
  %1151 = vmatprep.subr.mxu0 0.0
  %1152 = vmatpush1.msra.mxu0 0.0
  %1153 = vmatprep.subr.mxu0 0.0
  %1154 = vmatpush1.msra.mxu0 0.0
  %1155 = vmatprep.mubr.f32.mxu0 0.0
  %1156 = vmatmul.mubr.f32.gmra.mrb[0].mxu0 %v1004
  %v1157 = vpop.f32.mrb[0].mxu0
  %v1158 = vadd.f32 0.0, %v1157
  %v1159 = vpop.f32.mrb[0].mxu0
  %1160 = vdwg.mxu0
  %v1161 = vmul.f32 %v1088, %v1088
  %v1162 = vsub.f32 %v1158, %v1161
  %v1163 = vld [vmem:[%s6] sm:$0x1]
  %v1164 = vadd.f32 %v1162, 1e-05
  %v1165 = vrsqrt.pop %v1164
  %v1166 = vmul.f32 %v1163, %v1165
  %v1167 = vld [vmem:[%s7] sm:$0x1]
  %v1168 = vmul.f32 %v1088, %v1166
  %v1169 = vsub.f32 %v1167, %v1168
  %v1171 = vlaneseq
  %v1172 = vshrl.u32 %v1171, 7
  %v1173 = vsub.s32 0, %v1172
  %v1174 = vrot.slane %v1166, %v1173
  %v1176 = vmul.f32 %v979, %v1174
  %v1177 = vmul.f32 %v980, %v1174
  %v1178 = vmul.f32 %v981, %v1174
  %v1179 = vmul.f32 %v982, %v1174
  %v1181 = vlaneseq
  %v1182 = vshrl.u32 %v1181, 7
  %v1183 = vsub.s32 0, %v1182
  %v1184 = vrot.slane %v1169, %v1183
  %v1186 = vadd.f32 %v1176, %v1184
  %v1187 = vadd.f32 %v1177, %v1184
  %v1188 = vadd.f32 %v1178, %v1184
  %v1189 = vadd.f32 %v1179, %v1184
  %v1190 = vadd.f32 %v1186, %v34
  %v1191 = vadd.f32 %v1187, %v35
  %v1192 = vadd.f32 %v1188, %v36
  %v1193 = vadd.f32 %v1189, %v37
  %v1194 = vmax.f32 %v1190, 0.0
  %v1195 = vmax.f32 %v1191, 0.0
  %v1196 = vmax.f32 %v1192, 0.0
  %v1197 = vmax.f32 %v1193, 0.0
  %1198 = vst [vmem:[%s8] sm:$0xff] %v1194
  %1199 = vst [vmem:[%s8 + $0x8] sm:$0xff] %v1195
  %1200 = vst [vmem:[%s8 + $0x10] sm:$0xff] %v1196
  %1201 = vst [vmem:[%s8 + $0x18] sm:$0xff] %v1197
  // Predicated region
  $region34: #{residual_block.1} parent=0 // pred_check
    _
  $region35: #{residual_block.1} parent=0 // pred_check_branch
    %1203 = sbr.rel (0) target = $region37
  $region36: #{residual_block.1} parent=0 // pred_region
    _
  $region37: #{residual_block.1} parent=0 // pred_fallthru
    _
  // Predicated region
  $region38: #{residual_block.1} parent=0 // pred_check
    _
  $region39: #{residual_block.1} parent=0 // pred_check_branch
    %1205 = sbr.rel (0) target = $region41
  $region40: #{residual_block.1} parent=0 // pred_region
    _
  $region41: #{residual_block.1} parent=0 // pred_fallthru
    _

</llo_original>
